<compile_context>
chip_gen: v7x
topology: tpu7x:2x2x1
jax: 0.10.0
libtpu: 0.0.40
codegen_flags: <defaults>
</compile_context>

<pallas_src>
import functools

import jax
import jax.numpy as jnp
from jax import lax
from jax.experimental import pallas as pl
from jax.experimental.pallas import tpu as pltpu

DEFAULT_BLOCK_B = 16   # bf16 sublane tile is (16, 128)


def _round_up(x: int, m: int) -> int:
    return ((x + m - 1) // m) * m


def _masked_softmax(scores, t_valid):
    """f32 softmax over the last (lane) axis; lanes >= t_valid masked out.

    The mask is only materialized when padding actually exists (trace-time check);
    exp(-1e30 - m) underflows to 0 so no second select is needed.
    """
    if t_valid < scores.shape[-1]:
        lane = lax.broadcasted_iota(jnp.int32, scores.shape, scores.ndim - 1)
        scores = jnp.where(lane < t_valid, scores, -1e30)
    m = jnp.max(scores, axis=-1, keepdims=True)
    e = jnp.exp(scores - m)
    denom = jnp.sum(e, axis=-1, keepdims=True)
    # EUP approximate reciprocal: the divide leaves the VALU slot.
    return e * pl.reciprocal(denom, approx=True)


# ----------------------------------------------------------------------------------
# Kernels.  Blocks: h (BB,1,Hp) or (BB,Hp) bf16, enc (BB,Tp,Hp) bf16, out (BB,1,Tp) f32.
# bf16 MXU operands, f32 accumulation, f32 softmax / tanh.
# ----------------------------------------------------------------------------------

def _dot_attn_kernel(h_ref, enc_ref, out_ref, *, t_valid):
    # scores[b,0,t] = sum_h hidden[b,h] * enc[b,t,h]   (bf16 MXU batched matvec)
    scores = jnp.einsum("bqh,bth->bqt", h_ref[...], enc_ref[...],
                        preferred_element_type=jnp.float32)
    out_ref[...] = _masked_softmax(scores, t_valid)


def _general_attn_kernel(h_ref, enc_ref, w_ref, out_ref, *, t_valid):
    # Fold the Linear into the query: (h W) . enc.  Bias dropped (constant over T under
    # softmax shift-invariance).  w_ref holds W (not W^T), so hw[k] = sum_h h[h] W[h,k].
    hw = jnp.dot(h_ref[...], w_ref[...], preferred_element_type=jnp.float32)   # (BB, Hp) f32
    q = hw[:, None, :].astype(jnp.bfloat16)                                    # (BB, 1, Hp)
    scores = jnp.einsum("bqh,bth->bqt", q, enc_ref[...],
                        preferred_element_type=jnp.float32)
    out_ref[...] = _masked_softmax(scores, t_valid)


def _concat_attn_kernel(h_ref, enc_ref, w1t_ref, w2t_ref, b_ref, v_ref, out_ref,
                        *, t_valid):
    BB, Tp, Hp = enc_ref.shape
    # concat Linear without jnp.concatenate: W^T is pre-split in the wrapper into the
    # hidden half (w1t) and the encoder half (w2t).
    eh = jnp.dot(h_ref[...], w1t_ref[...],
                 preferred_element_type=jnp.float32) + b_ref[...]              # (BB, Hp) f32
    ee = jnp.dot(enc_ref[...].reshape(BB * Tp, Hp), w2t_ref[...],
                 preferred_element_type=jnp.float32).reshape(BB, Tp, Hp)       # f32
    # Replicate the hidden half over T with a second-minor broadcast add (no selection
    # matmul / iota work per grid step).
    energy = jnp.tanh(ee + eh[:, None, :])            # f32 elementwise (v5e-safe)
    v_b = jnp.broadcast_to(v_ref[...], (BB, 1, Hp))   # bf16, leading-dim broadcast only
    scores = jnp.einsum("bqh,bth->bqt", v_b, energy.astype(jnp.bfloat16),
                        preferred_element_type=jnp.float32)
    out_ref[...] = _masked_softmax(scores, t_valid)


# ----------------------------------------------------------------------------------
# Wrapper
# ----------------------------------------------------------------------------------

def prepare_encoder_outputs(encoder_outputs, *, block_b=DEFAULT_BLOCK_B):
    """One-time layout plumbing (hoisted out of the per-decode-step path).

    Transposes (T, B, H) encoder outputs to batch-major, zero-pads to hardware tiles and
    casts to bf16.  Encoder outputs are constant across decode steps, so this HBM round
    trip happens once per sequence instead of once per attention call.
    """
    T, B, H = encoder_outputs.shape
    BB = int(block_b)
    Bp = _round_up(B, BB)
    Tp = _round_up(T, 128)    # lanes (softmax / output axis)
    Hp = _round_up(H, 128)    # lanes (contraction axis)
    enc = jnp.transpose(encoder_outputs, (1, 0, 2)).astype(jnp.float32)
    enc = jnp.pad(enc, ((0, Bp - B), (0, Tp - T), (0, Hp - H))).astype(jnp.bfloat16)
    return enc, (T, B, H, BB, Bp, Tp, Hp)


def attn_forward(method, hidden, encoder_outputs=None, params=None, *,
                 prepared=None, block_b=DEFAULT_BLOCK_B):
    """Pallas forward of the PyTorch `Attn` module.

    hidden:          (1, B, H)  decoder state for the current step
    encoder_outputs: (T, B, H)  (ignored if `prepared` is given)
    prepared:        optional result of prepare_encoder_outputs() (hoisted per-sequence)
    returns:         (B, 1, T)  attention weights (softmax over T)
    """
    if method not in ("dot", "general", "concat"):
        raise ValueError(method, "is not an appropriate attention method.")
    if prepared is None:
        prepared = prepare_encoder_outputs(encoder_outputs, block_b=block_b)
    enc, (T, B, H, BB, Bp, Tp, Hp) = prepared
    nb = Bp // BB   # NOTE: on v7x keep nb >= 2 (choose BB <= Bp/2) so both TCs are used

    def pad(x, shape):
        return jnp.pad(x.astype(jnp.float32),
                       [(0, s - d) for d, s in zip(x.shape, shape)])

    h2 = pad(hidden[0], (Bp, Hp)).astype(jnp.bfloat16)                 # (Bp, Hp)

    h2_spec = pl.BlockSpec((BB, Hp), lambda i: (i, 0))
    h3_spec = pl.BlockSpec((BB, 1, Hp), lambda i: (i, 0, 0))
    enc_spec = pl.BlockSpec((BB, Tp, Hp), lambda i: (i, 0, 0))
    w_spec = pl.BlockSpec((Hp, Hp), lambda i: (0, 0))
    row_spec = pl.BlockSpec((1, Hp), lambda i: (0, 0))
    v_spec = pl.BlockSpec((1, 1, Hp), lambda i: (0, 0, 0))
    out_spec = pl.BlockSpec((BB, 1, Tp), lambda i: (i, 0, 0))

    if method == "dot":
        kernel = functools.partial(_dot_attn_kernel, t_valid=T)
        inputs = (h2[:, None, :], enc)
        in_specs = [h3_spec, enc_spec]
    elif method == "general":
        # Pass W itself (not W^T): score = (h @ W) . enc ; bias folded away (softmax
        # shift-invariance), so no bias input at all.
        w = pad(params["attn_w"], (Hp, Hp)).astype(jnp.bfloat16)
        kernel = functools.partial(_general_attn_kernel, t_valid=T)
        inputs = (h2, enc, w)
        in_specs = [h2_spec, enc_spec, w_spec]
    else:  # concat
        wt_full = params["attn_w"].T                                   # (2H, H)
        w1t = pad(wt_full[:H], (Hp, Hp)).astype(jnp.bfloat16)          # hidden half
        w2t = pad(wt_full[H:], (Hp, Hp)).astype(jnp.bfloat16)          # encoder half
        b = pad(params["attn_b"], (Hp,))[None, :]                      # (1, Hp) f32
        v = pad(params["v"], (Hp,))[None, None, :].astype(jnp.bfloat16)
        kernel = functools.partial(_concat_attn_kernel, t_valid=T)
        inputs = (h2, enc, w1t, w2t, b, v)
        in_specs = [h2_spec, enc_spec, w_spec, w_spec, row_spec, v_spec]

    # VMEM budget: enc/h/out double-buffers + resident weights + the concat f32 energy
    # temp.  Clamped to [32, 64] MiB so the limit is valid on v7x (64 MiB physical) as
    # well as v5e/v6e (128 MiB).
    vmem_need = (2 * BB * Tp * Hp * 2      # enc double buffer (bf16)
                 + 2 * BB * Hp * 2         # hidden double buffer (bf16)
                 + 2 * BB * Tp * 4         # output double buffer (f32)
                 + 3 * Hp * Hp * 2         # resident weights (worst case: concat)
                 + BB * Tp * Hp * 4)       # concat f32 energy temporary
    vmem_limit = int(max(32 << 20, min(64 << 20, int(1.25 * vmem_need) + (2 << 20))))

    out = pl.pallas_call(
        kernel,
        grid=(nb,),
        in_specs=in_specs,
        out_specs=out_spec,
        out_shape=jax.ShapeDtypeStruct((Bp, 1, Tp), jnp.float32),
        compiler_params=pltpu.CompilerParams(
            dimension_semantics=("parallel",),     # batch blocks shard across TCs (v7x)
            vmem_limit_bytes=vmem_limit),
    )(*inputs)

    return out[:B, :, :T]                          # (B, 1, T) == softmax(...).unsqueeze(1)


# ----------------------------------------------------------------------------------
# Pure-JAX reference (mirrors the PyTorch module; operands bf16-rounded like the kernel)
# ----------------------------------------------------------------------------------

def attn_reference(method, hidden, encoder_outputs, params=None):
    bf = lambda x: x.astype(jnp.bfloat16).astype(jnp.float32)
    h = bf(hidden)                    # (1, B, H)
    enc = bf(encoder_outputs)         # (T, B, H)
    if method == "dot":
        energies = jnp.sum(h * enc, axis=2)                                   # (T, B)
    elif method == "general":
        w, b = bf(params["attn_w"]), params["attn_b"].astype(jnp.float32)
        energy = jnp.einsum("tbk,hk->tbh", enc, w) + b
        energies = jnp.sum(h * energy, axis=2)
    else:  # concat
        w, b = bf(params["attn_w"]), params["attn_b"].astype(jnp.float32)
        v = params["v"].astype(jnp.float32)
        cat = jnp.concatenate([jnp.broadcast_to(h, enc.shape), enc], axis=2)  # (T, B, 2H)
        energy = jnp.tanh(jnp.einsum("tbj,hj->tbh", cat, w) + b)
        energies = jnp.sum(v * energy, axis=2)
    return jax.nn.softmax(energies.T, axis=1)[:, None, :]                     # (B, 1, T)


if __name__ == "__main__":
    B, T, H = 2, 8, 32                # small shapes consistent with the module
    key = jax.random.PRNGKey(0)
    k_h, k_e, k_gw, k_gb, k_cw, k_cb, k_cv = jax.random.split(key, 7)

    hidden = jax.random.normal(k_h, (1, B, H), jnp.float32)
    encoder_outputs = jax.random.normal(k_e, (T, B, H), jnp.float32)
    all_params = {
        "dot": None,
        "general": {
            "attn_w": 0.2 * jax.random.normal(k_gw, (H, H), jnp.float32),
            "attn_b": 0.2 * jax.random.normal(k_gb, (H,), jnp.float32),
        },
        "concat": {
            "attn_w": 0.2 * jax.random.normal(k_cw, (H, 2 * H), jnp.float32),
            "attn_b": 0.2 * jax.random.normal(k_cb, (H,), jnp.float32),
            "v": jax.random.normal(k_cv, (H,), jnp.float32),
        },
    }

    # Encoder layout plumbing hoisted: prepared once per sequence, reused for every call.
    prepared = prepare_encoder_outputs(encoder_outputs)

    for method in ("dot", "general", "concat"):
        out = attn_forward(method, hidden, encoder_outputs, all_params[method],
                           prepared=prepared)
        out = jax.block_until_ready(out)
        ref = attn_reference(method, hidden, encoder_outputs, all_params[method])
        assert out.shape == (B, 1, T), (method, out.shape)
        # rows are softmax distributions over the true T positions (approx reciprocal)
        assert bool(jnp.all(jnp.abs(jnp.sum(out, axis=2) - 1.0) < 1e-2)), method
        # bf16 operands + bf16 MXU score path vs the f32 reference
        err = float(jnp.max(jnp.abs(out - ref)))
        assert err < 2.5e-2, (method, err)

    print("KERNEL_OK")
</pallas_src>

<mosaic_0001>
module attributes {stable_mosaic.version = 11 : i64} {
  func.func @_dot_attn_kernel(%arg0: i32, %arg1: memref<16x1x128xbf16, #tpu.memory_space<vmem>>, %arg2: memref<16x128x128xbf16, #tpu.memory_space<vmem>>, %arg3: memref<16x1x128xf32, #tpu.memory_space<vmem>>) attributes {dimension_semantics = [#tpu.dimension_semantics<parallel>], iteration_bounds = array<i64: 1>, scalar_prefetch = 0 : i64, scratch_operands = 0 : i64, tpu.core_type = #tpu.core_type<tc>, window_params = [{transform_indices = @transform_0, window_bounds = array<i64: 16, 1, 128>}, {transform_indices = @transform_1, window_bounds = array<i64: 16, 128, 128>}, {transform_indices = @transform_2, window_bounds = array<i64: 16, 1, 128>}]} {
    %c0 = arith.constant 0 : index
    %c0_0 = arith.constant 0 : index
    %c0_1 = arith.constant 0 : index
    %0 = vector.load %arg1[%c0, %c0_0, %c0_1] : memref<16x1x128xbf16, #tpu.memory_space<vmem>>, vector<16x1x128xbf16>
    %c0_2 = arith.constant 0 : index
    %c0_3 = arith.constant 0 : index
    %c0_4 = arith.constant 0 : index
    %1 = vector.load %arg2[%c0_2, %c0_3, %c0_4] : memref<16x128x128xbf16, #tpu.memory_space<vmem>>, vector<16x128x128xbf16>
    "tpu.trace_start"() <{level = 10 : i32, message = "bqh,bth->bqt"}> : () -> ()
    %cst = arith.constant dense<0.000000e+00> : vector<16x1x128xf32>
    %2 = tpu.matmul %0, %1, %cst {dimension_numbers = #tpu.dot_dimension_numbers<[2], [2], [1], [1], [0, 0, 0, 1, 1, 1], [0], [0]>} : vector<16x1x128xbf16>, vector<16x128x128xbf16>, vector<16x1x128xf32> -> vector<16x1x128xf32>
    "tpu.trace_stop"() : () -> ()
    %3 = tpu.iota {dimensions = array<i32: 2>} : vector<16x1x128xi32>
    %c8_i32 = arith.constant 8 : i32
    %4 = vector.broadcast %c8_i32 : i32 to vector<16x1x128xi32>
    %5 = arith.cmpi slt, %3, %4 : vector<16x1x128xi32>
    %cst_5 = arith.constant -1.000000e+30 : f32
    %6 = vector.broadcast %cst_5 : f32 to vector<16x1x128xf32>
    %7 = arith.select %5, %2, %6 : vector<16x1x128xi1>, vector<16x1x128xf32>
    %cst_6 = arith.constant dense<0xFF800000> : vector<16x1xf32>
    %8 = vector.multi_reduction <maximumf>, %7, %cst_6 [2] : vector<16x1x128xf32> to vector<16x1xf32>
    %9 = vector.shape_cast %8 : vector<16x1xf32> to vector<16x1x1xf32>
    %10 = vector.broadcast %9 : vector<16x1x1xf32> to vector<16x1x128xf32>
    %11 = arith.subf %7, %10 : vector<16x1x128xf32>
    %12 = math.exp %11 : vector<16x1x128xf32>
    %cst_7 = arith.constant dense<0.000000e+00> : vector<16x1xf32>
    %13 = vector.multi_reduction <add>, %12, %cst_7 [2] : vector<16x1x128xf32> to vector<16x1xf32>
    %14 = vector.shape_cast %13 : vector<16x1xf32> to vector<16x1x1xf32>
    %15 = tpu.reciprocal %14 {approx = true} : vector<16x1x1xf32> -> vector<16x1x1xf32>
    %16 = vector.broadcast %15 : vector<16x1x1xf32> to vector<16x1x128xf32>
    %17 = arith.mulf %12, %16 : vector<16x1x128xf32>
    %c0_8 = arith.constant 0 : index
    %c0_9 = arith.constant 0 : index
    %c0_10 = arith.constant 0 : index
    %18 = vector.load %arg3[%c0_8, %c0_9, %c0_10] : memref<16x1x128xf32, #tpu.memory_space<vmem>>, vector<16x1x128xf32>
    tpu.vector_store %arg3[%c0_8, %c0_9, %c0_10], %17 {strides = array<i32>} : memref<16x1x128xf32, #tpu.memory_space<vmem>>, vector<16x1x128xf32>,
    return
  }
  func.func @transform_0(%arg0: i32) -> (i32, i32, i32) {
    %c0_i32 = arith.constant 0 : i32
    %c0_i32_0 = arith.constant 0 : i32
    %c0_i32_1 = arith.constant 0 : i32
    return %arg0, %c0_i32, %c0_i32_0 : i32, i32, i32
  }
  func.func @transform_1(%arg0: i32) -> (i32, i32, i32) {
    %c0_i32 = arith.constant 0 : i32
    %c0_i32_0 = arith.constant 0 : i32
    %c0_i32_1 = arith.constant 0 : i32
    return %arg0, %c0_i32, %c0_i32_0 : i32, i32, i32
  }
  func.func @transform_2(%arg0: i32) -> (i32, i32, i32) {
    %c0_i32 = arith.constant 0 : i32
    %c0_i32_0 = arith.constant 0 : i32
    %c0_i32_1 = arith.constant 0 : i32
    return %arg0, %c0_i32, %c0_i32_0 : i32, i32, i32
  }
}

</mosaic_0001>

<llo_original>
// kernel: tpu_custom_call.1
$region0: #{tpu_custom_call.1}
  #allocation0 [shape = 'u32[]', space=smem, size = 0x4, offset = 0x4, fixed_abs, tag = 'smem constant byte address 0x4 - core index']
  #allocation1 [shape = 'u32[144,128]{1,0:T(1,128)}', space=vmem, size = 0x12000, scoped, tag = 'internal scratch']
  %s0 = inlined_call_operand.vmem [shape: bf16[16,1,128], index: 0, kind: input, shape index: {}]
  %s1 = inlined_call_operand.hbm [shape: bf16[16,128,128], index: 1, kind: input, shape index: {}]
  %s2 = inlined_call_operand.hbm [shape: f32[16,1,128], index: 2, kind: output, shape index: {}]
  %s3 = sld [smem:[#allocation0]]
  $region22: #{tpu_custom_call.1} parent=0
    _
  %s5 = ssub.s32 1, %s3
  %s6 = scalar_select 0, %s5, %s3
  $region1: #{tpu_custom_call.1} parent=0
    #allocation2 [shape = 'u8[524288]{0}', space=vmem, size = 0x80000, scoped, tag = 'input window, operand 1, single buffered']
    #allocation3 [shape = 's32[1]{0}', space=sflag, size = 0x4, scoped, tag = 'scoped memory for tpu_custom_call.1']
    #allocation4 [shape = 's32[1]{0}', space=sflag, size = 0x4, scoped, tag = 'scoped memory for tpu_custom_call.1']
    #allocation5 [shape = 'u8[8192]{0}', space=vmem, size = 0x2000, scoped, tag = 'output window, operand 0, single buffered']
    %7 = vsyncpa [#allocation3], 0
    %8 = vsyncpa [#allocation4], 0
    // Predicated region
    $region2: #{tpu_custom_call.1} parent=1 // pred_check
      _
    $region3: #{tpu_custom_call.1} parent=1 // pred_check_branch
      %10 = sbr.rel (0) target = $region5
    $region4: #{tpu_custom_call.1} parent=1 // pred_region
      _
    $region5: #{tpu_custom_call.1} parent=1 // pred_fallthru
      _
    // Predicated region
    $region6: #{tpu_custom_call.1} parent=1 // pred_check
      _
    $region7: #{tpu_custom_call.1} parent=1 // pred_check_branch
      %12 = sbr.rel (0) target = $region9
    $region8: #{tpu_custom_call.1} parent=1 // pred_region
      %s14 = ssub.s32 16384, 16384
      %15 = vsyncadd [#allocation3], %s14
      %s16 = sshll.u32 [#allocation2], 4
      %s17 = int_to_ptr.vmem [resolvable:$true] %s16
      %22 = dma.hbm_to_vmem [thread:$0]  %s1, 16384, %s17, [#allocation3], 64, 64, 4
    $region9: #{tpu_custom_call.1} parent=1 // pred_fallthru
      _
    // Predicated region
    $region10: #{tpu_custom_call.1} parent=1 // pred_check
      _
    $region11: #{tpu_custom_call.1} parent=1 // pred_check_branch
      %24 = sbr.rel (0) target = $region13
    $region12: #{tpu_custom_call.1} parent=1 // pred_region
      %25 = dma.done [#allocation3], 16384
    $region13: #{tpu_custom_call.1} parent=1 // pred_fallthru
      _
    %v27 = vld [vmem:[%s0] sm:$0x1]
    %v28 = vld [vmem:[%s0 + $0x1] sm:$0x1]
    %v29 = vld [vmem:[%s0 + $0x2] sm:$0x1]
    %v30 = vld [vmem:[%s0 + $0x3] sm:$0x1]
    %v31 = vld [vmem:[%s0 + $0x4] sm:$0x1]
    %v32 = vld [vmem:[%s0 + $0x5] sm:$0x1]
    %v33 = vld [vmem:[%s0 + $0x6] sm:$0x1]
    %v34 = vld [vmem:[%s0 + $0x7] sm:$0x1]
    %v35 = vld [vmem:[%s0 + $0x8] sm:$0x1]
    %v36 = vld [vmem:[%s0 + $0x9] sm:$0x1]
    %v37 = vld [vmem:[%s0 + $0xa] sm:$0x1]
    %v38 = vld [vmem:[%s0 + $0xb] sm:$0x1]
    %v39 = vld [vmem:[%s0 + $0xc] sm:$0x1]
    %v40 = vld [vmem:[%s0 + $0xd] sm:$0x1]
    %v41 = vld [vmem:[%s0 + $0xe] sm:$0x1]
    %v42 = vld [vmem:[%s0 + $0xf] sm:$0x1]
    %v43 = vld [vmem:[#allocation2] sm:$0xf]
    %v44 = vld [vmem:[#allocation2 + $0x4] sm:$0xf]
    %v45 = vld [vmem:[#allocation2 + $0x8] sm:$0xf]
    %v46 = vld [vmem:[#allocation2 + $0xc] sm:$0xf]
    %v47 = vld [vmem:[#allocation2 + $0x10] sm:$0xf]
    %v48 = vld [vmem:[#allocation2 + $0x14] sm:$0xf]
    %v49 = vld [vmem:[#allocation2 + $0x18] sm:$0xf]
    %v50 = vld [vmem:[#allocation2 + $0x1c] sm:$0xf]
    %v51 = vld [vmem:[#allocation2 + $0x20] sm:$0xf]
    %v52 = vld [vmem:[#allocation2 + $0x24] sm:$0xf]
    %v53 = vld [vmem:[#allocation2 + $0x28] sm:$0xf]
    %v54 = vld [vmem:[#allocation2 + $0x2c] sm:$0xf]
    %v55 = vld [vmem:[#allocation2 + $0x30] sm:$0xf]
    %v56 = vld [vmem:[#allocation2 + $0x34] sm:$0xf]
    %v57 = vld [vmem:[#allocation2 + $0x38] sm:$0xf]
    %v58 = vld [vmem:[#allocation2 + $0x3c] sm:$0xf]
    %v59 = vld [vmem:[#allocation2 + $0x40] sm:$0xf]
    %v60 = vld [vmem:[#allocation2 + $0x44] sm:$0xf]
    %v61 = vld [vmem:[#allocation2 + $0x48] sm:$0xf]
    %v62 = vld [vmem:[#allocation2 + $0x4c] sm:$0xf]
    %v63 = vld [vmem:[#allocation2 + $0x50] sm:$0xf]
    %v64 = vld [vmem:[#allocation2 + $0x54] sm:$0xf]
    %v65 = vld [vmem:[#allocation2 + $0x58] sm:$0xf]
    %v66 = vld [vmem:[#allocation2 + $0x5c] sm:$0xf]
    %v67 = vld [vmem:[#allocation2 + $0x60] sm:$0xf]
    %v68 = vld [vmem:[#allocation2 + $0x64] sm:$0xf]
    %v69 = vld [vmem:[#allocation2 + $0x68] sm:$0xf]
    %v70 = vld [vmem:[#allocation2 + $0x6c] sm:$0xf]
    %v71 = vld [vmem:[#allocation2 + $0x70] sm:$0xf]
    %v72 = vld [vmem:[#allocation2 + $0x74] sm:$0xf]
    %v73 = vld [vmem:[#allocation2 + $0x78] sm:$0xf]
    %v74 = vld [vmem:[#allocation2 + $0x7c] sm:$0xf]
    %v75 = vld [vmem:[#allocation2 + $0x80] sm:$0xf]
    %v76 = vld [vmem:[#allocation2 + $0x84] sm:$0xf]
    %v77 = vld [vmem:[#allocation2 + $0x88] sm:$0xf]
    %v78 = vld [vmem:[#allocation2 + $0x8c] sm:$0xf]
    %v79 = vld [vmem:[#allocation2 + $0x90] sm:$0xf]
    %v80 = vld [vmem:[#allocation2 + $0x94] sm:$0xf]
    %v81 = vld [vmem:[#allocation2 + $0x98] sm:$0xf]
    %v82 = vld [vmem:[#allocation2 + $0x9c] sm:$0xf]
    %v83 = vld [vmem:[#allocation2 + $0xa0] sm:$0xf]
    %v84 = vld [vmem:[#allocation2 + $0xa4] sm:$0xf]
    %v85 = vld [vmem:[#allocation2 + $0xa8] sm:$0xf]
    %v86 = vld [vmem:[#allocation2 + $0xac] sm:$0xf]
    %v87 = vld [vmem:[#allocation2 + $0xb0] sm:$0xf]
    %v88 = vld [vmem:[#allocation2 + $0xb4] sm:$0xf]
    %v89 = vld [vmem:[#allocation2 + $0xb8] sm:$0xf]
    %v90 = vld [vmem:[#allocation2 + $0xbc] sm:$0xf]
    %v91 = vld [vmem:[#allocation2 + $0xc0] sm:$0xf]
    %v92 = vld [vmem:[#allocation2 + $0xc4] sm:$0xf]
    %v93 = vld [vmem:[#allocation2 + $0xc8] sm:$0xf]
    %v94 = vld [vmem:[#allocation2 + $0xcc] sm:$0xf]
    %v95 = vld [vmem:[#allocation2 + $0xd0] sm:$0xf]
    %v96 = vld [vmem:[#allocation2 + $0xd4] sm:$0xf]
    %v97 = vld [vmem:[#allocation2 + $0xd8] sm:$0xf]
    %v98 = vld [vmem:[#allocation2 + $0xdc] sm:$0xf]
    %v99 = vld [vmem:[#allocation2 + $0xe0] sm:$0xf]
    %v100 = vld [vmem:[#allocation2 + $0xe4] sm:$0xf]
    %v101 = vld [vmem:[#allocation2 + $0xe8] sm:$0xf]
    %v102 = vld [vmem:[#allocation2 + $0xec] sm:$0xf]
    %v103 = vld [vmem:[#allocation2 + $0xf0] sm:$0xf]
    %v104 = vld [vmem:[#allocation2 + $0xf4] sm:$0xf]
    %v105 = vld [vmem:[#allocation2 + $0xf8] sm:$0xf]
    %v106 = vld [vmem:[#allocation2 + $0xfc] sm:$0xf]
    %v107 = vld [vmem:[#allocation2 + $0x100] sm:$0xf]
    %v108 = vld [vmem:[#allocation2 + $0x104] sm:$0xf]
    %v109 = vld [vmem:[#allocation2 + $0x108] sm:$0xf]
    %v110 = vld [vmem:[#allocation2 + $0x10c] sm:$0xf]
    %v111 = vld [vmem:[#allocation2 + $0x110] sm:$0xf]
    %v112 = vld [vmem:[#allocation2 + $0x114] sm:$0xf]
    %v113 = vld [vmem:[#allocation2 + $0x118] sm:$0xf]
    %v114 = vld [vmem:[#allocation2 + $0x11c] sm:$0xf]
    %v115 = vld [vmem:[#allocation2 + $0x120] sm:$0xf]
    %v116 = vld [vmem:[#allocation2 + $0x124] sm:$0xf]
    %v117 = vld [vmem:[#allocation2 + $0x128] sm:$0xf]
    %v118 = vld [vmem:[#allocation2 + $0x12c] sm:$0xf]
    %v119 = vld [vmem:[#allocation2 + $0x130] sm:$0xf]
    %v120 = vld [vmem:[#allocation2 + $0x134] sm:$0xf]
    %v121 = vld [vmem:[#allocation2 + $0x138] sm:$0xf]
    %v122 = vld [vmem:[#allocation2 + $0x13c] sm:$0xf]
    %v123 = vld [vmem:[#allocation2 + $0x140] sm:$0xf]
    %v124 = vld [vmem:[#allocation2 + $0x144] sm:$0xf]
    %v125 = vld [vmem:[#allocation2 + $0x148] sm:$0xf]
    %v126 = vld [vmem:[#allocation2 + $0x14c] sm:$0xf]
    %v127 = vld [vmem:[#allocation2 + $0x150] sm:$0xf]
    %v128 = vld [vmem:[#allocation2 + $0x154] sm:$0xf]
    %v129 = vld [vmem:[#allocation2 + $0x158] sm:$0xf]
    %v130 = vld [vmem:[#allocation2 + $0x15c] sm:$0xf]
    %v131 = vld [vmem:[#allocation2 + $0x160] sm:$0xf]
    %v132 = vld [vmem:[#allocation2 + $0x164] sm:$0xf]
    %v133 = vld [vmem:[#allocation2 + $0x168] sm:$0xf]
    %v134 = vld [vmem:[#allocation2 + $0x16c] sm:$0xf]
    %v135 = vld [vmem:[#allocation2 + $0x170] sm:$0xf]
    %v136 = vld [vmem:[#allocation2 + $0x174] sm:$0xf]
    %v137 = vld [vmem:[#allocation2 + $0x178] sm:$0xf]
    %v138 = vld [vmem:[#allocation2 + $0x17c] sm:$0xf]
    %v139 = vld [vmem:[#allocation2 + $0x180] sm:$0xf]
    %v140 = vld [vmem:[#allocation2 + $0x184] sm:$0xf]
    %v141 = vld [vmem:[#allocation2 + $0x188] sm:$0xf]
    %v142 = vld [vmem:[#allocation2 + $0x18c] sm:$0xf]
    %v143 = vld [vmem:[#allocation2 + $0x190] sm:$0xf]
    %v144 = vld [vmem:[#allocation2 + $0x194] sm:$0xf]
    %v145 = vld [vmem:[#allocation2 + $0x198] sm:$0xf]
    %v146 = vld [vmem:[#allocation2 + $0x19c] sm:$0xf]
    %v147 = vld [vmem:[#allocation2 + $0x1a0] sm:$0xf]
    %v148 = vld [vmem:[#allocation2 + $0x1a4] sm:$0xf]
    %v149 = vld [vmem:[#allocation2 + $0x1a8] sm:$0xf]
    %v150 = vld [vmem:[#allocation2 + $0x1ac] sm:$0xf]
    %v151 = vld [vmem:[#allocation2 + $0x1b0] sm:$0xf]
    %v152 = vld [vmem:[#allocation2 + $0x1b4] sm:$0xf]
    %v153 = vld [vmem:[#allocation2 + $0x1b8] sm:$0xf]
    %v154 = vld [vmem:[#allocation2 + $0x1bc] sm:$0xf]
    %v155 = vld [vmem:[#allocation2 + $0x1c0] sm:$0xf]
    %v156 = vld [vmem:[#allocation2 + $0x1c4] sm:$0xf]
    %v157 = vld [vmem:[#allocation2 + $0x1c8] sm:$0xf]
    %v158 = vld [vmem:[#allocation2 + $0x1cc] sm:$0xf]
    %v159 = vld [vmem:[#allocation2 + $0x1d0] sm:$0xf]
    %v160 = vld [vmem:[#allocation2 + $0x1d4] sm:$0xf]
    %v161 = vld [vmem:[#allocation2 + $0x1d8] sm:$0xf]
    %v162 = vld [vmem:[#allocation2 + $0x1dc] sm:$0xf]
    %v163 = vld [vmem:[#allocation2 + $0x1e0] sm:$0xf]
    %v164 = vld [vmem:[#allocation2 + $0x1e4] sm:$0xf]
    %v165 = vld [vmem:[#allocation2 + $0x1e8] sm:$0xf]
    %v166 = vld [vmem:[#allocation2 + $0x1ec] sm:$0xf]
    %v167 = vld [vmem:[#allocation2 + $0x1f0] sm:$0xf]
    %v168 = vld [vmem:[#allocation2 + $0x1f4] sm:$0xf]
    %v169 = vld [vmem:[#allocation2 + $0x1f8] sm:$0xf]
    %v170 = vld [vmem:[#allocation2 + $0x1fc] sm:$0xf]
    %v171 = vld [vmem:[#allocation2 + $0x200] sm:$0xf]
    %v172 = vld [vmem:[#allocation2 + $0x204] sm:$0xf]
    %v173 = vld [vmem:[#allocation2 + $0x208] sm:$0xf]
    %v174 = vld [vmem:[#allocation2 + $0x20c] sm:$0xf]
    %v175 = vld [vmem:[#allocation2 + $0x210] sm:$0xf]
    %v176 = vld [vmem:[#allocation2 + $0x214] sm:$0xf]
    %v177 = vld [vmem:[#allocation2 + $0x218] sm:$0xf]
    %v178 = vld [vmem:[#allocation2 + $0x21c] sm:$0xf]
    %v179 = vld [vmem:[#allocation2 + $0x220] sm:$0xf]
    %v180 = vld [vmem:[#allocation2 + $0x224] sm:$0xf]
    %v181 = vld [vmem:[#allocation2 + $0x228] sm:$0xf]
    %v182 = vld [vmem:[#allocation2 + $0x22c] sm:$0xf]
    %v183 = vld [vmem:[#allocation2 + $0x230] sm:$0xf]
    %v184 = vld [vmem:[#allocation2 + $0x234] sm:$0xf]
    %v185 = vld [vmem:[#allocation2 + $0x238] sm:$0xf]
    %v186 = vld [vmem:[#allocation2 + $0x23c] sm:$0xf]
    %v187 = vld [vmem:[#allocation2 + $0x240] sm:$0xf]
    %v188 = vld [vmem:[#allocation2 + $0x244] sm:$0xf]
    %v189 = vld [vmem:[#allocation2 + $0x248] sm:$0xf]
    %v190 = vld [vmem:[#allocation2 + $0x24c] sm:$0xf]
    %v191 = vld [vmem:[#allocation2 + $0x250] sm:$0xf]
    %v192 = vld [vmem:[#allocation2 + $0x254] sm:$0xf]
    %v193 = vld [vmem:[#allocation2 + $0x258] sm:$0xf]
    %v194 = vld [vmem:[#allocation2 + $0x25c] sm:$0xf]
    %v195 = vld [vmem:[#allocation2 + $0x260] sm:$0xf]
    %v196 = vld [vmem:[#allocation2 + $0x264] sm:$0xf]
    %v197 = vld [vmem:[#allocation2 + $0x268] sm:$0xf]
    %v198 = vld [vmem:[#allocation2 + $0x26c] sm:$0xf]
    %v199 = vld [vmem:[#allocation2 + $0x270] sm:$0xf]
    %v200 = vld [vmem:[#allocation2 + $0x274] sm:$0xf]
    %v201 = vld [vmem:[#allocation2 + $0x278] sm:$0xf]
    %v202 = vld [vmem:[#allocation2 + $0x27c] sm:$0xf]
    %v203 = vld [vmem:[#allocation2 + $0x280] sm:$0xf]
    %v204 = vld [vmem:[#allocation2 + $0x284] sm:$0xf]
    %v205 = vld [vmem:[#allocation2 + $0x288] sm:$0xf]
    %v206 = vld [vmem:[#allocation2 + $0x28c] sm:$0xf]
    %v207 = vld [vmem:[#allocation2 + $0x290] sm:$0xf]
    %v208 = vld [vmem:[#allocation2 + $0x294] sm:$0xf]
    %v209 = vld [vmem:[#allocation2 + $0x298] sm:$0xf]
    %v210 = vld [vmem:[#allocation2 + $0x29c] sm:$0xf]
    %v211 = vld [vmem:[#allocation2 + $0x2a0] sm:$0xf]
    %v212 = vld [vmem:[#allocation2 + $0x2a4] sm:$0xf]
    %v213 = vld [vmem:[#allocation2 + $0x2a8] sm:$0xf]
    %v214 = vld [vmem:[#allocation2 + $0x2ac] sm:$0xf]
    %v215 = vld [vmem:[#allocation2 + $0x2b0] sm:$0xf]
    %v216 = vld [vmem:[#allocation2 + $0x2b4] sm:$0xf]
    %v217 = vld [vmem:[#allocation2 + $0x2b8] sm:$0xf]
    %v218 = vld [vmem:[#allocation2 + $0x2bc] sm:$0xf]
    %v219 = vld [vmem:[#allocation2 + $0x2c0] sm:$0xf]
    %v220 = vld [vmem:[#allocation2 + $0x2c4] sm:$0xf]
    %v221 = vld [vmem:[#allocation2 + $0x2c8] sm:$0xf]
    %v222 = vld [vmem:[#allocation2 + $0x2cc] sm:$0xf]
    %v223 = vld [vmem:[#allocation2 + $0x2d0] sm:$0xf]
    %v224 = vld [vmem:[#allocation2 + $0x2d4] sm:$0xf]
    %v225 = vld [vmem:[#allocation2 + $0x2d8] sm:$0xf]
    %v226 = vld [vmem:[#allocation2 + $0x2dc] sm:$0xf]
    %v227 = vld [vmem:[#allocation2 + $0x2e0] sm:$0xf]
    %v228 = vld [vmem:[#allocation2 + $0x2e4] sm:$0xf]
    %v229 = vld [vmem:[#allocation2 + $0x2e8] sm:$0xf]
    %v230 = vld [vmem:[#allocation2 + $0x2ec] sm:$0xf]
    %v231 = vld [vmem:[#allocation2 + $0x2f0] sm:$0xf]
    %v232 = vld [vmem:[#allocation2 + $0x2f4] sm:$0xf]
    %v233 = vld [vmem:[#allocation2 + $0x2f8] sm:$0xf]
    %v234 = vld [vmem:[#allocation2 + $0x2fc] sm:$0xf]
    %v235 = vld [vmem:[#allocation2 + $0x300] sm:$0xf]
    %v236 = vld [vmem:[#allocation2 + $0x304] sm:$0xf]
    %v237 = vld [vmem:[#allocation2 + $0x308] sm:$0xf]
    %v238 = vld [vmem:[#allocation2 + $0x30c] sm:$0xf]
    %v239 = vld [vmem:[#allocation2 + $0x310] sm:$0xf]
    %v240 = vld [vmem:[#allocation2 + $0x314] sm:$0xf]
    %v241 = vld [vmem:[#allocation2 + $0x318] sm:$0xf]
    %v242 = vld [vmem:[#allocation2 + $0x31c] sm:$0xf]
    %v243 = vld [vmem:[#allocation2 + $0x320] sm:$0xf]
    %v244 = vld [vmem:[#allocation2 + $0x324] sm:$0xf]
    %v245 = vld [vmem:[#allocation2 + $0x328] sm:$0xf]
    %v246 = vld [vmem:[#allocation2 + $0x32c] sm:$0xf]
    %v247 = vld [vmem:[#allocation2 + $0x330] sm:$0xf]
    %v248 = vld [vmem:[#allocation2 + $0x334] sm:$0xf]
    %v249 = vld [vmem:[#allocation2 + $0x338] sm:$0xf]
    %v250 = vld [vmem:[#allocation2 + $0x33c] sm:$0xf]
    %v251 = vld [vmem:[#allocation2 + $0x340] sm:$0xf]
    %v252 = vld [vmem:[#allocation2 + $0x344] sm:$0xf]
    %v253 = vld [vmem:[#allocation2 + $0x348] sm:$0xf]
    %v254 = vld [vmem:[#allocation2 + $0x34c] sm:$0xf]
    %v255 = vld [vmem:[#allocation2 + $0x350] sm:$0xf]
    %v256 = vld [vmem:[#allocation2 + $0x354] sm:$0xf]
    %v257 = vld [vmem:[#allocation2 + $0x358] sm:$0xf]
    %v258 = vld [vmem:[#allocation2 + $0x35c] sm:$0xf]
    %v259 = vld [vmem:[#allocation2 + $0x360] sm:$0xf]
    %v260 = vld [vmem:[#allocation2 + $0x364] sm:$0xf]
    %v261 = vld [vmem:[#allocation2 + $0x368] sm:$0xf]
    %v262 = vld [vmem:[#allocation2 + $0x36c] sm:$0xf]
    %v263 = vld [vmem:[#allocation2 + $0x370] sm:$0xf]
    %v264 = vld [vmem:[#allocation2 + $0x374] sm:$0xf]
    %v265 = vld [vmem:[#allocation2 + $0x378] sm:$0xf]
    %v266 = vld [vmem:[#allocation2 + $0x37c] sm:$0xf]
    %v267 = vld [vmem:[#allocation2 + $0x380] sm:$0xf]
    %v268 = vld [vmem:[#allocation2 + $0x384] sm:$0xf]
    %v269 = vld [vmem:[#allocation2 + $0x388] sm:$0xf]
    %v270 = vld [vmem:[#allocation2 + $0x38c] sm:$0xf]
    %v271 = vld [vmem:[#allocation2 + $0x390] sm:$0xf]
    %v272 = vld [vmem:[#allocation2 + $0x394] sm:$0xf]
    %v273 = vld [vmem:[#allocation2 + $0x398] sm:$0xf]
    %v274 = vld [vmem:[#allocation2 + $0x39c] sm:$0xf]
    %v275 = vld [vmem:[#allocation2 + $0x3a0] sm:$0xf]
    %v276 = vld [vmem:[#allocation2 + $0x3a4] sm:$0xf]
    %v277 = vld [vmem:[#allocation2 + $0x3a8] sm:$0xf]
    %v278 = vld [vmem:[#allocation2 + $0x3ac] sm:$0xf]
    %v279 = vld [vmem:[#allocation2 + $0x3b0] sm:$0xf]
    %v280 = vld [vmem:[#allocation2 + $0x3b4] sm:$0xf]
    %v281 = vld [vmem:[#allocation2 + $0x3b8] sm:$0xf]
    %v282 = vld [vmem:[#allocation2 + $0x3bc] sm:$0xf]
    %v283 = vld [vmem:[#allocation2 + $0x3c0] sm:$0xf]
    %v284 = vld [vmem:[#allocation2 + $0x3c4] sm:$0xf]
    %v285 = vld [vmem:[#allocation2 + $0x3c8] sm:$0xf]
    %v286 = vld [vmem:[#allocation2 + $0x3cc] sm:$0xf]
    %v287 = vld [vmem:[#allocation2 + $0x3d0] sm:$0xf]
    %v288 = vld [vmem:[#allocation2 + $0x3d4] sm:$0xf]
    %v289 = vld [vmem:[#allocation2 + $0x3d8] sm:$0xf]
    %v290 = vld [vmem:[#allocation2 + $0x3dc] sm:$0xf]
    %v291 = vld [vmem:[#allocation2 + $0x3e0] sm:$0xf]
    %v292 = vld [vmem:[#allocation2 + $0x3e4] sm:$0xf]
    %v293 = vld [vmem:[#allocation2 + $0x3e8] sm:$0xf]
    %v294 = vld [vmem:[#allocation2 + $0x3ec] sm:$0xf]
    %v295 = vld [vmem:[#allocation2 + $0x3f0] sm:$0xf]
    %v296 = vld [vmem:[#allocation2 + $0x3f4] sm:$0xf]
    %v297 = vld [vmem:[#allocation2 + $0x3f8] sm:$0xf]
    %v298 = vld [vmem:[#allocation2 + $0x3fc] sm:$0xf]
    %v315 = vunpack.c.l.b16 %v43
    %v316 = vunpack.c.l.b16 %v44
    %v317 = vunpack.c.l.b16 %v45
    %v318 = vunpack.c.l.b16 %v46
    %v319 = vunpack.c.l.b16 %v47
    %v320 = vunpack.c.l.b16 %v48
    %v321 = vunpack.c.l.b16 %v49
    %v322 = vunpack.c.l.b16 %v50
    %v323 = vunpack.c.l.b16 %v51
    %v324 = vunpack.c.l.b16 %v52
    %v325 = vunpack.c.l.b16 %v53
    %v326 = vunpack.c.l.b16 %v54
    %v327 = vunpack.c.l.b16 %v55
    %v328 = vunpack.c.l.b16 %v56
    %v329 = vunpack.c.l.b16 %v57
    %v330 = vunpack.c.l.b16 %v58
    %v331 = vpack.c.b16 %v316, %v315
    %v332 = vpack.c.b16 %v318, %v317
    %v333 = vpack.c.b16 %v320, %v319
    %v334 = vpack.c.b16 %v322, %v321
    %v335 = vpack.c.b16 %v324, %v323
    %v336 = vpack.c.b16 %v326, %v325
    %v337 = vpack.c.b16 %v328, %v327
    %v338 = vpack.c.b16 %v330, %v329
    %347 = vmatprep.subr.bf16.mxu0 0
    %348 = vmatpush1.bf16.xpose.msra.mxu0 %v331
    %349 = vmatprep.subr.bf16.mxu0 0
    %350 = vmatpush1.bf16.xpose.msra.mxu0 %v332
    %351 = vmatprep.subr.bf16.mxu0 0
    %352 = vmatpush1.bf16.xpose.msra.mxu0 %v333
    %353 = vmatprep.subr.bf16.mxu0 0
    %354 = vmatpush1.bf16.xpose.msra.mxu0 %v334
    %355 = vmatprep.subr.bf16.mxu0 0
    %356 = vmatpush1.bf16.xpose.msra.mxu0 %v335
    %357 = vmatprep.subr.bf16.mxu0 0
    %358 = vmatpush1.bf16.xpose.msra.mxu0 %v336
    %359 = vmatprep.subr.bf16.mxu0 0
    %360 = vmatpush1.bf16.xpose.msra.mxu0 %v337
    %361 = vmatprep.subr.bf16.mxu0 0
    %362 = vmatpush1.bf16.xpose.msra.mxu0 %v338
    %363 = vmatprep.subr.bf16.mxu0 0
    %364 = vmatpush1.bf16.xpose.msra.mxu0 0
    %365 = vmatprep.subr.bf16.mxu0 0
    %366 = vmatpush1.bf16.xpose.msra.mxu0 0
    %367 = vmatprep.subr.bf16.mxu0 0
    %368 = vmatpush1.bf16.xpose.msra.mxu0 0
    %369 = vmatprep.subr.bf16.mxu0 0
    %370 = vmatpush1.bf16.xpose.msra.mxu0 0
    %371 = vmatprep.subr.bf16.mxu0 0
    %372 = vmatpush1.bf16.xpose.msra.mxu0 0
    %373 = vmatprep.subr.bf16.mxu0 0
    %374 = vmatpush1.bf16.xpose.msra.mxu0 0
    %375 = vmatprep.subr.bf16.mxu0 0
    %376 = vmatpush1.bf16.xpose.msra.mxu0 0
    %377 = vmatprep.subr.bf16.mxu0 0
    %378 = vmatpush1.bf16.xpose.msra.mxu0 0
    %379 = vmatprep.mubr.bf16.mxu0 0
    %380 = vmatmul.mubr.bf16.gmra.mrb[0].mxu0 %v27
    %v381 = vpop.f32.mrb[0].mxu0
    %v382 = vadd.f32 0.0, %v381
    %v383 = vpop.f32.mrb[0].mxu0
    %v384 = vpop.f32.mrb[0].mxu0
    %v385 = vpop.f32.mrb[0].mxu0
    %386 = vdwg.mxu0
    %v403 = vunpack.c.l.b16 %v59
    %v404 = vunpack.c.l.b16 %v60
    %v405 = vunpack.c.l.b16 %v61
    %v406 = vunpack.c.l.b16 %v62
    %v407 = vunpack.c.l.b16 %v63
    %v408 = vunpack.c.l.b16 %v64
    %v409 = vunpack.c.l.b16 %v65
    %v410 = vunpack.c.l.b16 %v66
    %v411 = vunpack.c.l.b16 %v67
    %v412 = vunpack.c.l.b16 %v68
    %v413 = vunpack.c.l.b16 %v69
    %v414 = vunpack.c.l.b16 %v70
    %v415 = vunpack.c.l.b16 %v71
    %v416 = vunpack.c.l.b16 %v72
    %v417 = vunpack.c.l.b16 %v73
    %v418 = vunpack.c.l.b16 %v74
    %v419 = vpack.c.b16 %v404, %v403
    %v420 = vpack.c.b16 %v406, %v405
    %v421 = vpack.c.b16 %v408, %v407
    %v422 = vpack.c.b16 %v410, %v409
    %v423 = vpack.c.b16 %v412, %v411
    %v424 = vpack.c.b16 %v414, %v413
    %v425 = vpack.c.b16 %v416, %v415
    %v426 = vpack.c.b16 %v418, %v417
    %435 = vmatprep.subr.bf16.mxu0 0
    %436 = vmatpush1.bf16.xpose.msra.mxu0 %v419
    %437 = vmatprep.subr.bf16.mxu0 0
    %438 = vmatpush1.bf16.xpose.msra.mxu0 %v420
    %439 = vmatprep.subr.bf16.mxu0 0
    %440 = vmatpush1.bf16.xpose.msra.mxu0 %v421
    %441 = vmatprep.subr.bf16.mxu0 0
    %442 = vmatpush1.bf16.xpose.msra.mxu0 %v422
    %443 = vmatprep.subr.bf16.mxu0 0
    %444 = vmatpush1.bf16.xpose.msra.mxu0 %v423
    %445 = vmatprep.subr.bf16.mxu0 0
    %446 = vmatpush1.bf16.xpose.msra.mxu0 %v424
    %447 = vmatprep.subr.bf16.mxu0 0
    %448 = vmatpush1.bf16.xpose.msra.mxu0 %v425
    %449 = vmatprep.subr.bf16.mxu0 0
    %450 = vmatpush1.bf16.xpose.msra.mxu0 %v426
    %451 = vmatprep.subr.bf16.mxu0 0
    %452 = vmatpush1.bf16.xpose.msra.mxu0 0
    %453 = vmatprep.subr.bf16.mxu0 0
    %454 = vmatpush1.bf16.xpose.msra.mxu0 0
    %455 = vmatprep.subr.bf16.mxu0 0
    %456 = vmatpush1.bf16.xpose.msra.mxu0 0
    %457 = vmatprep.subr.bf16.mxu0 0
    %458 = vmatpush1.bf16.xpose.msra.mxu0 0
    %459 = vmatprep.subr.bf16.mxu0 0
    %460 = vmatpush1.bf16.xpose.msra.mxu0 0
    %461 = vmatprep.subr.bf16.mxu0 0
    %462 = vmatpush1.bf16.xpose.msra.mxu0 0
    %463 = vmatprep.subr.bf16.mxu0 0
    %464 = vmatpush1.bf16.xpose.msra.mxu0 0
    %465 = vmatprep.subr.bf16.mxu0 0
    %466 = vmatpush1.bf16.xpose.msra.mxu0 0
    %467 = vmatprep.mubr.bf16.mxu0 0
    %468 = vmatmul.mubr.bf16.gmra.mrb[0].mxu0 %v28
    %v469 = vpop.f32.mrb[0].mxu0
    %v470 = vadd.f32 0.0, %v469
    %v471 = vpop.f32.mrb[0].mxu0
    %v472 = vpop.f32.mrb[0].mxu0
    %v473 = vpop.f32.mrb[0].mxu0
    %474 = vdwg.mxu0
    %v491 = vunpack.c.l.b16 %v75
    %v492 = vunpack.c.l.b16 %v76
    %v493 = vunpack.c.l.b16 %v77
    %v494 = vunpack.c.l.b16 %v78
    %v495 = vunpack.c.l.b16 %v79
    %v496 = vunpack.c.l.b16 %v80
    %v497 = vunpack.c.l.b16 %v81
    %v498 = vunpack.c.l.b16 %v82
    %v499 = vunpack.c.l.b16 %v83
    %v500 = vunpack.c.l.b16 %v84
    %v501 = vunpack.c.l.b16 %v85
    %v502 = vunpack.c.l.b16 %v86
    %v503 = vunpack.c.l.b16 %v87
    %v504 = vunpack.c.l.b16 %v88
    %v505 = vunpack.c.l.b16 %v89
    %v506 = vunpack.c.l.b16 %v90
    %v507 = vpack.c.b16 %v492, %v491
    %v508 = vpack.c.b16 %v494, %v493
    %v509 = vpack.c.b16 %v496, %v495
    %v510 = vpack.c.b16 %v498, %v497
    %v511 = vpack.c.b16 %v500, %v499
    %v512 = vpack.c.b16 %v502, %v501
    %v513 = vpack.c.b16 %v504, %v503
    %v514 = vpack.c.b16 %v506, %v505
    %523 = vmatprep.subr.bf16.mxu0 0
    %524 = vmatpush1.bf16.xpose.msra.mxu0 %v507
    %525 = vmatprep.subr.bf16.mxu0 0
    %526 = vmatpush1.bf16.xpose.msra.mxu0 %v508
    %527 = vmatprep.subr.bf16.mxu0 0
    %528 = vmatpush1.bf16.xpose.msra.mxu0 %v509
    %529 = vmatprep.subr.bf16.mxu0 0
    %530 = vmatpush1.bf16.xpose.msra.mxu0 %v510
    %531 = vmatprep.subr.bf16.mxu0 0
    %532 = vmatpush1.bf16.xpose.msra.mxu0 %v511
    %533 = vmatprep.subr.bf16.mxu0 0
    %534 = vmatpush1.bf16.xpose.msra.mxu0 %v512
    %535 = vmatprep.subr.bf16.mxu0 0
    %536 = vmatpush1.bf16.xpose.msra.mxu0 %v513
    %537 = vmatprep.subr.bf16.mxu0 0
    %538 = vmatpush1.bf16.xpose.msra.mxu0 %v514
    %539 = vmatprep.subr.bf16.mxu0 0
    %540 = vmatpush1.bf16.xpose.msra.mxu0 0
    %541 = vmatprep.subr.bf16.mxu0 0
    %542 = vmatpush1.bf16.xpose.msra.mxu0 0
    %543 = vmatprep.subr.bf16.mxu0 0
    %544 = vmatpush1.bf16.xpose.msra.mxu0 0
    %545 = vmatprep.subr.bf16.mxu0 0
    %546 = vmatpush1.bf16.xpose.msra.mxu0 0
    %547 = vmatprep.subr.bf16.mxu0 0
    %548 = vmatpush1.bf16.xpose.msra.mxu0 0
    %549 = vmatprep.subr.bf16.mxu0 0
    %550 = vmatpush1.bf16.xpose.msra.mxu0 0
    %551 = vmatprep.subr.bf16.mxu0 0
    %552 = vmatpush1.bf16.xpose.msra.mxu0 0
    %553 = vmatprep.subr.bf16.mxu0 0
    %554 = vmatpush1.bf16.xpose.msra.mxu0 0
    %555 = vmatprep.mubr.bf16.mxu0 0
    %556 = vmatmul.mubr.bf16.gmra.mrb[0].mxu0 %v29
    %v557 = vpop.f32.mrb[0].mxu0
    %v558 = vadd.f32 0.0, %v557
    %v559 = vpop.f32.mrb[0].mxu0
    %v560 = vpop.f32.mrb[0].mxu0
    %v561 = vpop.f32.mrb[0].mxu0
    %562 = vdwg.mxu0
    %v579 = vunpack.c.l.b16 %v91
    %v580 = vunpack.c.l.b16 %v92
    %v581 = vunpack.c.l.b16 %v93
    %v582 = vunpack.c.l.b16 %v94
    %v583 = vunpack.c.l.b16 %v95
    %v584 = vunpack.c.l.b16 %v96
    %v585 = vunpack.c.l.b16 %v97
    %v586 = vunpack.c.l.b16 %v98
    %v587 = vunpack.c.l.b16 %v99
    %v588 = vunpack.c.l.b16 %v100
    %v589 = vunpack.c.l.b16 %v101
    %v590 = vunpack.c.l.b16 %v102
    %v591 = vunpack.c.l.b16 %v103
    %v592 = vunpack.c.l.b16 %v104
    %v593 = vunpack.c.l.b16 %v105
    %v594 = vunpack.c.l.b16 %v106
    %v595 = vpack.c.b16 %v580, %v579
    %v596 = vpack.c.b16 %v582, %v581
    %v597 = vpack.c.b16 %v584, %v583
    %v598 = vpack.c.b16 %v586, %v585
    %v599 = vpack.c.b16 %v588, %v587
    %v600 = vpack.c.b16 %v590, %v589
    %v601 = vpack.c.b16 %v592, %v591
    %v602 = vpack.c.b16 %v594, %v593
    %611 = vmatprep.subr.bf16.mxu0 0
    %612 = vmatpush1.bf16.xpose.msra.mxu0 %v595
    %613 = vmatprep.subr.bf16.mxu0 0
    %614 = vmatpush1.bf16.xpose.msra.mxu0 %v596
    %615 = vmatprep.subr.bf16.mxu0 0
    %616 = vmatpush1.bf16.xpose.msra.mxu0 %v597
    %617 = vmatprep.subr.bf16.mxu0 0
    %618 = vmatpush1.bf16.xpose.msra.mxu0 %v598
    %619 = vmatprep.subr.bf16.mxu0 0
    %620 = vmatpush1.bf16.xpose.msra.mxu0 %v599
    %621 = vmatprep.subr.bf16.mxu0 0
    %622 = vmatpush1.bf16.xpose.msra.mxu0 %v600
    %623 = vmatprep.subr.bf16.mxu0 0
    %624 = vmatpush1.bf16.xpose.msra.mxu0 %v601
    %625 = vmatprep.subr.bf16.mxu0 0
    %626 = vmatpush1.bf16.xpose.msra.mxu0 %v602
    %627 = vmatprep.subr.bf16.mxu0 0
    %628 = vmatpush1.bf16.xpose.msra.mxu0 0
    %629 = vmatprep.subr.bf16.mxu0 0
    %630 = vmatpush1.bf16.xpose.msra.mxu0 0
    %631 = vmatprep.subr.bf16.mxu0 0
    %632 = vmatpush1.bf16.xpose.msra.mxu0 0
    %633 = vmatprep.subr.bf16.mxu0 0
    %634 = vmatpush1.bf16.xpose.msra.mxu0 0
    %635 = vmatprep.subr.bf16.mxu0 0
    %636 = vmatpush1.bf16.xpose.msra.mxu0 0
    %637 = vmatprep.subr.bf16.mxu0 0
    %638 = vmatpush1.bf16.xpose.msra.mxu0 0
    %639 = vmatprep.subr.bf16.mxu0 0
    %640 = vmatpush1.bf16.xpose.msra.mxu0 0
    %641 = vmatprep.subr.bf16.mxu0 0
    %642 = vmatpush1.bf16.xpose.msra.mxu0 0
    %643 = vmatprep.mubr.bf16.mxu0 0
    %644 = vmatmul.mubr.bf16.gmra.mrb[0].mxu0 %v30
    %v645 = vpop.f32.mrb[0].mxu0
    %v646 = vadd.f32 0.0, %v645
    %v647 = vpop.f32.mrb[0].mxu0
    %v648 = vpop.f32.mrb[0].mxu0
    %v649 = vpop.f32.mrb[0].mxu0
    %650 = vdwg.mxu0
    %v667 = vunpack.c.l.b16 %v107
    %v668 = vunpack.c.l.b16 %v108
    %v669 = vunpack.c.l.b16 %v109
    %v670 = vunpack.c.l.b16 %v110
    %v671 = vunpack.c.l.b16 %v111
    %v672 = vunpack.c.l.b16 %v112
    %v673 = vunpack.c.l.b16 %v113
    %v674 = vunpack.c.l.b16 %v114
    %v675 = vunpack.c.l.b16 %v115
    %v676 = vunpack.c.l.b16 %v116
    %v677 = vunpack.c.l.b16 %v117
    %v678 = vunpack.c.l.b16 %v118
    %v679 = vunpack.c.l.b16 %v119
    %v680 = vunpack.c.l.b16 %v120
    %v681 = vunpack.c.l.b16 %v121
    %v682 = vunpack.c.l.b16 %v122
    %v683 = vpack.c.b16 %v668, %v667
    %v684 = vpack.c.b16 %v670, %v669
    %v685 = vpack.c.b16 %v672, %v671
    %v686 = vpack.c.b16 %v674, %v673
    %v687 = vpack.c.b16 %v676, %v675
    %v688 = vpack.c.b16 %v678, %v677
    %v689 = vpack.c.b16 %v680, %v679
    %v690 = vpack.c.b16 %v682, %v681
    %699 = vmatprep.subr.bf16.mxu0 0
    %700 = vmatpush1.bf16.xpose.msra.mxu0 %v683
    %701 = vmatprep.subr.bf16.mxu0 0
    %702 = vmatpush1.bf16.xpose.msra.mxu0 %v684
    %703 = vmatprep.subr.bf16.mxu0 0
    %704 = vmatpush1.bf16.xpose.msra.mxu0 %v685
    %705 = vmatprep.subr.bf16.mxu0 0
    %706 = vmatpush1.bf16.xpose.msra.mxu0 %v686
    %707 = vmatprep.subr.bf16.mxu0 0
    %708 = vmatpush1.bf16.xpose.msra.mxu0 %v687
    %709 = vmatprep.subr.bf16.mxu0 0
    %710 = vmatpush1.bf16.xpose.msra.mxu0 %v688
    %711 = vmatprep.subr.bf16.mxu0 0
    %712 = vmatpush1.bf16.xpose.msra.mxu0 %v689
    %713 = vmatprep.subr.bf16.mxu0 0
    %714 = vmatpush1.bf16.xpose.msra.mxu0 %v690
    %715 = vmatprep.subr.bf16.mxu0 0
    %716 = vmatpush1.bf16.xpose.msra.mxu0 0
    %717 = vmatprep.subr.bf16.mxu0 0
    %718 = vmatpush1.bf16.xpose.msra.mxu0 0
    %719 = vmatprep.subr.bf16.mxu0 0
    %720 = vmatpush1.bf16.xpose.msra.mxu0 0
    %721 = vmatprep.subr.bf16.mxu0 0
    %722 = vmatpush1.bf16.xpose.msra.mxu0 0
    %723 = vmatprep.subr.bf16.mxu0 0
    %724 = vmatpush1.bf16.xpose.msra.mxu0 0
    %725 = vmatprep.subr.bf16.mxu0 0
    %726 = vmatpush1.bf16.xpose.msra.mxu0 0
    %727 = vmatprep.subr.bf16.mxu0 0
    %728 = vmatpush1.bf16.xpose.msra.mxu0 0
    %729 = vmatprep.subr.bf16.mxu0 0
    %730 = vmatpush1.bf16.xpose.msra.mxu0 0
    %731 = vmatprep.mubr.bf16.mxu0 0
    %732 = vmatmul.mubr.bf16.gmra.mrb[0].mxu0 %v31
    %v733 = vpop.f32.mrb[0].mxu0
    %v734 = vadd.f32 0.0, %v733
    %v735 = vpop.f32.mrb[0].mxu0
    %v736 = vpop.f32.mrb[0].mxu0
    %v737 = vpop.f32.mrb[0].mxu0
    %738 = vdwg.mxu0
    %v755 = vunpack.c.l.b16 %v123
    %v756 = vunpack.c.l.b16 %v124
    %v757 = vunpack.c.l.b16 %v125
    %v758 = vunpack.c.l.b16 %v126
    %v759 = vunpack.c.l.b16 %v127
    %v760 = vunpack.c.l.b16 %v128
    %v761 = vunpack.c.l.b16 %v129
    %v762 = vunpack.c.l.b16 %v130
    %v763 = vunpack.c.l.b16 %v131
    %v764 = vunpack.c.l.b16 %v132
    %v765 = vunpack.c.l.b16 %v133
    %v766 = vunpack.c.l.b16 %v134
    %v767 = vunpack.c.l.b16 %v135
    %v768 = vunpack.c.l.b16 %v136
    %v769 = vunpack.c.l.b16 %v137
    %v770 = vunpack.c.l.b16 %v138
    %v771 = vpack.c.b16 %v756, %v755
    %v772 = vpack.c.b16 %v758, %v757
    %v773 = vpack.c.b16 %v760, %v759
    %v774 = vpack.c.b16 %v762, %v761
    %v775 = vpack.c.b16 %v764, %v763
    %v776 = vpack.c.b16 %v766, %v765
    %v777 = vpack.c.b16 %v768, %v767
    %v778 = vpack.c.b16 %v770, %v769
    %787 = vmatprep.subr.bf16.mxu0 0
    %788 = vmatpush1.bf16.xpose.msra.mxu0 %v771
    %789 = vmatprep.subr.bf16.mxu0 0
    %790 = vmatpush1.bf16.xpose.msra.mxu0 %v772
    %791 = vmatprep.subr.bf16.mxu0 0
    %792 = vmatpush1.bf16.xpose.msra.mxu0 %v773
    %793 = vmatprep.subr.bf16.mxu0 0
    %794 = vmatpush1.bf16.xpose.msra.mxu0 %v774
    %795 = vmatprep.subr.bf16.mxu0 0
    %796 = vmatpush1.bf16.xpose.msra.mxu0 %v775
    %797 = vmatprep.subr.bf16.mxu0 0
    %798 = vmatpush1.bf16.xpose.msra.mxu0 %v776
    %799 = vmatprep.subr.bf16.mxu0 0
    %800 = vmatpush1.bf16.xpose.msra.mxu0 %v777
    %801 = vmatprep.subr.bf16.mxu0 0
    %802 = vmatpush1.bf16.xpose.msra.mxu0 %v778
    %803 = vmatprep.subr.bf16.mxu0 0
    %804 = vmatpush1.bf16.xpose.msra.mxu0 0
    %805 = vmatprep.subr.bf16.mxu0 0
    %806 = vmatpush1.bf16.xpose.msra.mxu0 0
    %807 = vmatprep.subr.bf16.mxu0 0
    %808 = vmatpush1.bf16.xpose.msra.mxu0 0
    %809 = vmatprep.subr.bf16.mxu0 0
    %810 = vmatpush1.bf16.xpose.msra.mxu0 0
    %811 = vmatprep.subr.bf16.mxu0 0
    %812 = vmatpush1.bf16.xpose.msra.mxu0 0
    %813 = vmatprep.subr.bf16.mxu0 0
    %814 = vmatpush1.bf16.xpose.msra.mxu0 0
    %815 = vmatprep.subr.bf16.mxu0 0
    %816 = vmatpush1.bf16.xpose.msra.mxu0 0
    %817 = vmatprep.subr.bf16.mxu0 0
    %818 = vmatpush1.bf16.xpose.msra.mxu0 0
    %819 = vmatprep.mubr.bf16.mxu0 0
    %820 = vmatmul.mubr.bf16.gmra.mrb[0].mxu0 %v32
    %v821 = vpop.f32.mrb[0].mxu0
    %v822 = vadd.f32 0.0, %v821
    %v823 = vpop.f32.mrb[0].mxu0
    %v824 = vpop.f32.mrb[0].mxu0
    %v825 = vpop.f32.mrb[0].mxu0
    %826 = vdwg.mxu0
    %v843 = vunpack.c.l.b16 %v139
    %v844 = vunpack.c.l.b16 %v140
    %v845 = vunpack.c.l.b16 %v141
    %v846 = vunpack.c.l.b16 %v142
    %v847 = vunpack.c.l.b16 %v143
    %v848 = vunpack.c.l.b16 %v144
    %v849 = vunpack.c.l.b16 %v145
    %v850 = vunpack.c.l.b16 %v146
    %v851 = vunpack.c.l.b16 %v147
    %v852 = vunpack.c.l.b16 %v148
    %v853 = vunpack.c.l.b16 %v149
    %v854 = vunpack.c.l.b16 %v150
    %v855 = vunpack.c.l.b16 %v151
    %v856 = vunpack.c.l.b16 %v152
    %v857 = vunpack.c.l.b16 %v153
    %v858 = vunpack.c.l.b16 %v154
    %v859 = vpack.c.b16 %v844, %v843
    %v860 = vpack.c.b16 %v846, %v845
    %v861 = vpack.c.b16 %v848, %v847
    %v862 = vpack.c.b16 %v850, %v849
    %v863 = vpack.c.b16 %v852, %v851
    %v864 = vpack.c.b16 %v854, %v853
    %v865 = vpack.c.b16 %v856, %v855
    %v866 = vpack.c.b16 %v858, %v857
    %875 = vmatprep.subr.bf16.mxu0 0
    %876 = vmatpush1.bf16.xpose.msra.mxu0 %v859
    %877 = vmatprep.subr.bf16.mxu0 0
    %878 = vmatpush1.bf16.xpose.msra.mxu0 %v860
    %879 = vmatprep.subr.bf16.mxu0 0
    %880 = vmatpush1.bf16.xpose.msra.mxu0 %v861
    %881 = vmatprep.subr.bf16.mxu0 0
    %882 = vmatpush1.bf16.xpose.msra.mxu0 %v862
    %883 = vmatprep.subr.bf16.mxu0 0
    %884 = vmatpush1.bf16.xpose.msra.mxu0 %v863
    %885 = vmatprep.subr.bf16.mxu0 0
    %886 = vmatpush1.bf16.xpose.msra.mxu0 %v864
    %887 = vmatprep.subr.bf16.mxu0 0
    %888 = vmatpush1.bf16.xpose.msra.mxu0 %v865
    %889 = vmatprep.subr.bf16.mxu0 0
    %890 = vmatpush1.bf16.xpose.msra.mxu0 %v866
    %891 = vmatprep.subr.bf16.mxu0 0
    %892 = vmatpush1.bf16.xpose.msra.mxu0 0
    %893 = vmatprep.subr.bf16.mxu0 0
    %894 = vmatpush1.bf16.xpose.msra.mxu0 0
    %895 = vmatprep.subr.bf16.mxu0 0
    %896 = vmatpush1.bf16.xpose.msra.mxu0 0
    %897 = vmatprep.subr.bf16.mxu0 0
    %898 = vmatpush1.bf16.xpose.msra.mxu0 0
    %899 = vmatprep.subr.bf16.mxu0 0
    %900 = vmatpush1.bf16.xpose.msra.mxu0 0
    %901 = vmatprep.subr.bf16.mxu0 0
    %902 = vmatpush1.bf16.xpose.msra.mxu0 0
    %903 = vmatprep.subr.bf16.mxu0 0
    %904 = vmatpush1.bf16.xpose.msra.mxu0 0
    %905 = vmatprep.subr.bf16.mxu0 0
    %906 = vmatpush1.bf16.xpose.msra.mxu0 0
    %907 = vmatprep.mubr.bf16.mxu0 0
    %908 = vmatmul.mubr.bf16.gmra.mrb[0].mxu0 %v33
    %v909 = vpop.f32.mrb[0].mxu0
    %v910 = vadd.f32 0.0, %v909
    %v911 = vpop.f32.mrb[0].mxu0
    %v912 = vpop.f32.mrb[0].mxu0
    %v913 = vpop.f32.mrb[0].mxu0
    %914 = vdwg.mxu0
    %v931 = vunpack.c.l.b16 %v155
    %v932 = vunpack.c.l.b16 %v156
    %v933 = vunpack.c.l.b16 %v157
    %v934 = vunpack.c.l.b16 %v158
    %v935 = vunpack.c.l.b16 %v159
    %v936 = vunpack.c.l.b16 %v160
    %v937 = vunpack.c.l.b16 %v161
    %v938 = vunpack.c.l.b16 %v162
    %v939 = vunpack.c.l.b16 %v163
    %v940 = vunpack.c.l.b16 %v164
    %v941 = vunpack.c.l.b16 %v165
    %v942 = vunpack.c.l.b16 %v166
    %v943 = vunpack.c.l.b16 %v167
    %v944 = vunpack.c.l.b16 %v168
    %v945 = vunpack.c.l.b16 %v169
    %v946 = vunpack.c.l.b16 %v170
    %v947 = vpack.c.b16 %v932, %v931
    %v948 = vpack.c.b16 %v934, %v933
    %v949 = vpack.c.b16 %v936, %v935
    %v950 = vpack.c.b16 %v938, %v937
    %v951 = vpack.c.b16 %v940, %v939
    %v952 = vpack.c.b16 %v942, %v941
    %v953 = vpack.c.b16 %v944, %v943
    %v954 = vpack.c.b16 %v946, %v945
    %963 = vmatprep.subr.bf16.mxu0 0
    %964 = vmatpush1.bf16.xpose.msra.mxu0 %v947
    %965 = vmatprep.subr.bf16.mxu0 0
    %966 = vmatpush1.bf16.xpose.msra.mxu0 %v948
    %967 = vmatprep.subr.bf16.mxu0 0
    %968 = vmatpush1.bf16.xpose.msra.mxu0 %v949
    %969 = vmatprep.subr.bf16.mxu0 0
    %970 = vmatpush1.bf16.xpose.msra.mxu0 %v950
    %971 = vmatprep.subr.bf16.mxu0 0
    %972 = vmatpush1.bf16.xpose.msra.mxu0 %v951
    %973 = vmatprep.subr.bf16.mxu0 0
    %974 = vmatpush1.bf16.xpose.msra.mxu0 %v952
    %975 = vmatprep.subr.bf16.mxu0 0
    %976 = vmatpush1.bf16.xpose.msra.mxu0 %v953
    %977 = vmatprep.subr.bf16.mxu0 0
    %978 = vmatpush1.bf16.xpose.msra.mxu0 %v954
    %979 = vmatprep.subr.bf16.mxu0 0
    %980 = vmatpush1.bf16.xpose.msra.mxu0 0
    %981 = vmatprep.subr.bf16.mxu0 0
    %982 = vmatpush1.bf16.xpose.msra.mxu0 0
    %983 = vmatprep.subr.bf16.mxu0 0
    %984 = vmatpush1.bf16.xpose.msra.mxu0 0
    %985 = vmatprep.subr.bf16.mxu0 0
    %986 = vmatpush1.bf16.xpose.msra.mxu0 0
    %987 = vmatprep.subr.bf16.mxu0 0
    %988 = vmatpush1.bf16.xpose.msra.mxu0 0
    %989 = vmatprep.subr.bf16.mxu0 0
    %990 = vmatpush1.bf16.xpose.msra.mxu0 0
    %991 = vmatprep.subr.bf16.mxu0 0
    %992 = vmatpush1.bf16.xpose.msra.mxu0 0
    %993 = vmatprep.subr.bf16.mxu0 0
    %994 = vmatpush1.bf16.xpose.msra.mxu0 0
    %995 = vmatprep.mubr.bf16.mxu0 0
    %996 = vmatmul.mubr.bf16.gmra.mrb[0].mxu0 %v34
    %v997 = vpop.f32.mrb[0].mxu0
    %v998 = vadd.f32 0.0, %v997
    %v999 = vpop.f32.mrb[0].mxu0
    %v1000 = vpop.f32.mrb[0].mxu0
    %v1001 = vpop.f32.mrb[0].mxu0
    %1002 = vdwg.mxu0
    %v1019 = vunpack.c.l.b16 %v171
    %v1020 = vunpack.c.l.b16 %v172
    %v1021 = vunpack.c.l.b16 %v173
    %v1022 = vunpack.c.l.b16 %v174
    %v1023 = vunpack.c.l.b16 %v175
    %v1024 = vunpack.c.l.b16 %v176
    %v1025 = vunpack.c.l.b16 %v177
    %v1026 = vunpack.c.l.b16 %v178
    %v1027 = vunpack.c.l.b16 %v179
    %v1028 = vunpack.c.l.b16 %v180
    %v1029 = vunpack.c.l.b16 %v181
    %v1030 = vunpack.c.l.b16 %v182
    %v1031 = vunpack.c.l.b16 %v183
    %v1032 = vunpack.c.l.b16 %v184
    %v1033 = vunpack.c.l.b16 %v185
    %v1034 = vunpack.c.l.b16 %v186
    %v1035 = vpack.c.b16 %v1020, %v1019
    %v1036 = vpack.c.b16 %v1022, %v1021
    %v1037 = vpack.c.b16 %v1024, %v1023
    %v1038 = vpack.c.b16 %v1026, %v1025
    %v1039 = vpack.c.b16 %v1028, %v1027
    %v1040 = vpack.c.b16 %v1030, %v1029
    %v1041 = vpack.c.b16 %v1032, %v1031
    %v1042 = vpack.c.b16 %v1034, %v1033
    %1051 = vmatprep.subr.bf16.mxu0 0
    %1052 = vmatpush1.bf16.xpose.msra.mxu0 %v1035
    %1053 = vmatprep.subr.bf16.mxu0 0
    %1054 = vmatpush1.bf16.xpose.msra.mxu0 %v1036
    %1055 = vmatprep.subr.bf16.mxu0 0
    %1056 = vmatpush1.bf16.xpose.msra.mxu0 %v1037
    %1057 = vmatprep.subr.bf16.mxu0 0
    %1058 = vmatpush1.bf16.xpose.msra.mxu0 %v1038
    %1059 = vmatprep.subr.bf16.mxu0 0
    %1060 = vmatpush1.bf16.xpose.msra.mxu0 %v1039
    %1061 = vmatprep.subr.bf16.mxu0 0
    %1062 = vmatpush1.bf16.xpose.msra.mxu0 %v1040
    %1063 = vmatprep.subr.bf16.mxu0 0
    %1064 = vmatpush1.bf16.xpose.msra.mxu0 %v1041
    %1065 = vmatprep.subr.bf16.mxu0 0
    %1066 = vmatpush1.bf16.xpose.msra.mxu0 %v1042
    %1067 = vmatprep.subr.bf16.mxu0 0
    %1068 = vmatpush1.bf16.xpose.msra.mxu0 0
    %1069 = vmatprep.subr.bf16.mxu0 0
    %1070 = vmatpush1.bf16.xpose.msra.mxu0 0
    %1071 = vmatprep.subr.bf16.mxu0 0
    %1072 = vmatpush1.bf16.xpose.msra.mxu0 0
    %1073 = vmatprep.subr.bf16.mxu0 0
    %1074 = vmatpush1.bf16.xpose.msra.mxu0 0
    %1075 = vmatprep.subr.bf16.mxu0 0
    %1076 = vmatpush1.bf16.xpose.msra.mxu0 0
    %1077 = vmatprep.subr.bf16.mxu0 0
    %1078 = vmatpush1.bf16.xpose.msra.mxu0 0
    %1079 = vmatprep.subr.bf16.mxu0 0
    %1080 = vmatpush1.bf16.xpose.msra.mxu0 0
    %1081 = vmatprep.subr.bf16.mxu0 0
    %1082 = vmatpush1.bf16.xpose.msra.mxu0 0
    %1083 = vmatprep.mubr.bf16.mxu0 0
    %1084 = vmatmul.mubr.bf16.gmra.mrb[0].mxu0 %v35
    %v1085 = vpop.f32.mrb[0].mxu0
    %v1086 = vadd.f32 0.0, %v1085
    %v1087 = vpop.f32.mrb[0].mxu0
    %v1088 = vpop.f32.mrb[0].mxu0
    %v1089 = vpop.f32.mrb[0].mxu0
    %1090 = vdwg.mxu0
    %v1107 = vunpack.c.l.b16 %v187
    %v1108 = vunpack.c.l.b16 %v188
    %v1109 = vunpack.c.l.b16 %v189
    %v1110 = vunpack.c.l.b16 %v190
    %v1111 = vunpack.c.l.b16 %v191
    %v1112 = vunpack.c.l.b16 %v192
    %v1113 = vunpack.c.l.b16 %v193
    %v1114 = vunpack.c.l.b16 %v194
    %v1115 = vunpack.c.l.b16 %v195
    %v1116 = vunpack.c.l.b16 %v196
    %v1117 = vunpack.c.l.b16 %v197
    %v1118 = vunpack.c.l.b16 %v198
    %v1119 = vunpack.c.l.b16 %v199
    %v1120 = vunpack.c.l.b16 %v200
    %v1121 = vunpack.c.l.b16 %v201
    %v1122 = vunpack.c.l.b16 %v202
    %v1123 = vpack.c.b16 %v1108, %v1107
    %v1124 = vpack.c.b16 %v1110, %v1109
    %v1125 = vpack.c.b16 %v1112, %v1111
    %v1126 = vpack.c.b16 %v1114, %v1113
    %v1127 = vpack.c.b16 %v1116, %v1115
    %v1128 = vpack.c.b16 %v1118, %v1117
    %v1129 = vpack.c.b16 %v1120, %v1119
    %v1130 = vpack.c.b16 %v1122, %v1121
    %1139 = vmatprep.subr.bf16.mxu0 0
    %1140 = vmatpush1.bf16.xpose.msra.mxu0 %v1123
    %1141 = vmatprep.subr.bf16.mxu0 0
    %1142 = vmatpush1.bf16.xpose.msra.mxu0 %v1124
    %1143 = vmatprep.subr.bf16.mxu0 0
    %1144 = vmatpush1.bf16.xpose.msra.mxu0 %v1125
    %1145 = vmatprep.subr.bf16.mxu0 0
    %1146 = vmatpush1.bf16.xpose.msra.mxu0 %v1126
    %1147 = vmatprep.subr.bf16.mxu0 0
    %1148 = vmatpush1.bf16.xpose.msra.mxu0 %v1127
    %1149 = vmatprep.subr.bf16.mxu0 0
    %1150 = vmatpush1.bf16.xpose.msra.mxu0 %v1128
    %1151 = vmatprep.subr.bf16.mxu0 0
    %1152 = vmatpush1.bf16.xpose.msra.mxu0 %v1129
    %1153 = vmatprep.subr.bf16.mxu0 0
    %1154 = vmatpush1.bf16.xpose.msra.mxu0 %v1130
    %1155 = vmatprep.subr.bf16.mxu0 0
    %1156 = vmatpush1.bf16.xpose.msra.mxu0 0
    %1157 = vmatprep.subr.bf16.mxu0 0
    %1158 = vmatpush1.bf16.xpose.msra.mxu0 0
    %1159 = vmatprep.subr.bf16.mxu0 0
    %1160 = vmatpush1.bf16.xpose.msra.mxu0 0
    %1161 = vmatprep.subr.bf16.mxu0 0
    %1162 = vmatpush1.bf16.xpose.msra.mxu0 0
    %1163 = vmatprep.subr.bf16.mxu0 0
    %1164 = vmatpush1.bf16.xpose.msra.mxu0 0
    %1165 = vmatprep.subr.bf16.mxu0 0
    %1166 = vmatpush1.bf16.xpose.msra.mxu0 0
    %1167 = vmatprep.subr.bf16.mxu0 0
    %1168 = vmatpush1.bf16.xpose.msra.mxu0 0
    %1169 = vmatprep.subr.bf16.mxu0 0
    %1170 = vmatpush1.bf16.xpose.msra.mxu0 0
    %1171 = vmatprep.mubr.bf16.mxu0 0
    %1172 = vmatmul.mubr.bf16.gmra.mrb[0].mxu0 %v36
    %v1173 = vpop.f32.mrb[0].mxu0
    %v1174 = vadd.f32 0.0, %v1173
    %v1175 = vpop.f32.mrb[0].mxu0
    %v1176 = vpop.f32.mrb[0].mxu0
    %v1177 = vpop.f32.mrb[0].mxu0
    %1178 = vdwg.mxu0
    %v1195 = vunpack.c.l.b16 %v203
    %v1196 = vunpack.c.l.b16 %v204
    %v1197 = vunpack.c.l.b16 %v205
    %v1198 = vunpack.c.l.b16 %v206
    %v1199 = vunpack.c.l.b16 %v207
    %v1200 = vunpack.c.l.b16 %v208
    %v1201 = vunpack.c.l.b16 %v209
    %v1202 = vunpack.c.l.b16 %v210
    %v1203 = vunpack.c.l.b16 %v211
    %v1204 = vunpack.c.l.b16 %v212
    %v1205 = vunpack.c.l.b16 %v213
    %v1206 = vunpack.c.l.b16 %v214
    %v1207 = vunpack.c.l.b16 %v215
    %v1208 = vunpack.c.l.b16 %v216
    %v1209 = vunpack.c.l.b16 %v217
    %v1210 = vunpack.c.l.b16 %v218
    %v1211 = vpack.c.b16 %v1196, %v1195
    %v1212 = vpack.c.b16 %v1198, %v1197
    %v1213 = vpack.c.b16 %v1200, %v1199
    %v1214 = vpack.c.b16 %v1202, %v1201
    %v1215 = vpack.c.b16 %v1204, %v1203
    %v1216 = vpack.c.b16 %v1206, %v1205
    %v1217 = vpack.c.b16 %v1208, %v1207
    %v1218 = vpack.c.b16 %v1210, %v1209
    %1227 = vmatprep.subr.bf16.mxu0 0
    %1228 = vmatpush1.bf16.xpose.msra.mxu0 %v1211
    %1229 = vmatprep.subr.bf16.mxu0 0
    %1230 = vmatpush1.bf16.xpose.msra.mxu0 %v1212
    %1231 = vmatprep.subr.bf16.mxu0 0
    %1232 = vmatpush1.bf16.xpose.msra.mxu0 %v1213
    %1233 = vmatprep.subr.bf16.mxu0 0
    %1234 = vmatpush1.bf16.xpose.msra.mxu0 %v1214
    %1235 = vmatprep.subr.bf16.mxu0 0
    %1236 = vmatpush1.bf16.xpose.msra.mxu0 %v1215
    %1237 = vmatprep.subr.bf16.mxu0 0
    %1238 = vmatpush1.bf16.xpose.msra.mxu0 %v1216
    %1239 = vmatprep.subr.bf16.mxu0 0
    %1240 = vmatpush1.bf16.xpose.msra.mxu0 %v1217
    %1241 = vmatprep.subr.bf16.mxu0 0
    %1242 = vmatpush1.bf16.xpose.msra.mxu0 %v1218
    %1243 = vmatprep.subr.bf16.mxu0 0
    %1244 = vmatpush1.bf16.xpose.msra.mxu0 0
    %1245 = vmatprep.subr.bf16.mxu0 0
    %1246 = vmatpush1.bf16.xpose.msra.mxu0 0
    %1247 = vmatprep.subr.bf16.mxu0 0
    %1248 = vmatpush1.bf16.xpose.msra.mxu0 0
    %1249 = vmatprep.subr.bf16.mxu0 0
    %1250 = vmatpush1.bf16.xpose.msra.mxu0 0
    %1251 = vmatprep.subr.bf16.mxu0 0
    %1252 = vmatpush1.bf16.xpose.msra.mxu0 0
    %1253 = vmatprep.subr.bf16.mxu0 0
    %1254 = vmatpush1.bf16.xpose.msra.mxu0 0
    %1255 = vmatprep.subr.bf16.mxu0 0
    %1256 = vmatpush1.bf16.xpose.msra.mxu0 0
    %1257 = vmatprep.subr.bf16.mxu0 0
    %1258 = vmatpush1.bf16.xpose.msra.mxu0 0
    %1259 = vmatprep.mubr.bf16.mxu0 0
    %1260 = vmatmul.mubr.bf16.gmra.mrb[0].mxu0 %v37
    %v1261 = vpop.f32.mrb[0].mxu0
    %v1262 = vadd.f32 0.0, %v1261
    %v1263 = vpop.f32.mrb[0].mxu0
    %v1264 = vpop.f32.mrb[0].mxu0
    %v1265 = vpop.f32.mrb[0].mxu0
    %1266 = vdwg.mxu0
    %v1283 = vunpack.c.l.b16 %v219
    %v1284 = vunpack.c.l.b16 %v220
    %v1285 = vunpack.c.l.b16 %v221
    %v1286 = vunpack.c.l.b16 %v222
    %v1287 = vunpack.c.l.b16 %v223
    %v1288 = vunpack.c.l.b16 %v224
    %v1289 = vunpack.c.l.b16 %v225
    %v1290 = vunpack.c.l.b16 %v226
    %v1291 = vunpack.c.l.b16 %v227
    %v1292 = vunpack.c.l.b16 %v228
    %v1293 = vunpack.c.l.b16 %v229
    %v1294 = vunpack.c.l.b16 %v230
    %v1295 = vunpack.c.l.b16 %v231
    %v1296 = vunpack.c.l.b16 %v232
    %v1297 = vunpack.c.l.b16 %v233
    %v1298 = vunpack.c.l.b16 %v234
    %v1299 = vpack.c.b16 %v1284, %v1283
    %v1300 = vpack.c.b16 %v1286, %v1285
    %v1301 = vpack.c.b16 %v1288, %v1287
    %v1302 = vpack.c.b16 %v1290, %v1289
    %v1303 = vpack.c.b16 %v1292, %v1291
    %v1304 = vpack.c.b16 %v1294, %v1293
    %v1305 = vpack.c.b16 %v1296, %v1295
    %v1306 = vpack.c.b16 %v1298, %v1297
    %1315 = vmatprep.subr.bf16.mxu0 0
    %1316 = vmatpush1.bf16.xpose.msra.mxu0 %v1299
    %1317 = vmatprep.subr.bf16.mxu0 0
    %1318 = vmatpush1.bf16.xpose.msra.mxu0 %v1300
    %1319 = vmatprep.subr.bf16.mxu0 0
    %1320 = vmatpush1.bf16.xpose.msra.mxu0 %v1301
    %1321 = vmatprep.subr.bf16.mxu0 0
    %1322 = vmatpush1.bf16.xpose.msra.mxu0 %v1302
    %1323 = vmatprep.subr.bf16.mxu0 0
    %1324 = vmatpush1.bf16.xpose.msra.mxu0 %v1303
    %1325 = vmatprep.subr.bf16.mxu0 0
    %1326 = vmatpush1.bf16.xpose.msra.mxu0 %v1304
    %1327 = vmatprep.subr.bf16.mxu0 0
    %1328 = vmatpush1.bf16.xpose.msra.mxu0 %v1305
    %1329 = vmatprep.subr.bf16.mxu0 0
    %1330 = vmatpush1.bf16.xpose.msra.mxu0 %v1306
    %1331 = vmatprep.subr.bf16.mxu0 0
    %1332 = vmatpush1.bf16.xpose.msra.mxu0 0
    %1333 = vmatprep.subr.bf16.mxu0 0
    %1334 = vmatpush1.bf16.xpose.msra.mxu0 0
    %1335 = vmatprep.subr.bf16.mxu0 0
    %1336 = vmatpush1.bf16.xpose.msra.mxu0 0
    %1337 = vmatprep.subr.bf16.mxu0 0
    %1338 = vmatpush1.bf16.xpose.msra.mxu0 0
    %1339 = vmatprep.subr.bf16.mxu0 0
    %1340 = vmatpush1.bf16.xpose.msra.mxu0 0
    %1341 = vmatprep.subr.bf16.mxu0 0
    %1342 = vmatpush1.bf16.xpose.msra.mxu0 0
    %1343 = vmatprep.subr.bf16.mxu0 0
    %1344 = vmatpush1.bf16.xpose.msra.mxu0 0
    %1345 = vmatprep.subr.bf16.mxu0 0
    %1346 = vmatpush1.bf16.xpose.msra.mxu0 0
    %1347 = vmatprep.mubr.bf16.mxu0 0
    %1348 = vmatmul.mubr.bf16.gmra.mrb[0].mxu0 %v38
    %v1349 = vpop.f32.mrb[0].mxu0
    %v1350 = vadd.f32 0.0, %v1349
    %v1351 = vpop.f32.mrb[0].mxu0
    %v1352 = vpop.f32.mrb[0].mxu0
    %v1353 = vpop.f32.mrb[0].mxu0
    %1354 = vdwg.mxu0
    %v1371 = vunpack.c.l.b16 %v235
    %v1372 = vunpack.c.l.b16 %v236
    %v1373 = vunpack.c.l.b16 %v237
    %v1374 = vunpack.c.l.b16 %v238
    %v1375 = vunpack.c.l.b16 %v239
    %v1376 = vunpack.c.l.b16 %v240
    %v1377 = vunpack.c.l.b16 %v241
    %v1378 = vunpack.c.l.b16 %v242
    %v1379 = vunpack.c.l.b16 %v243
    %v1380 = vunpack.c.l.b16 %v244
    %v1381 = vunpack.c.l.b16 %v245
    %v1382 = vunpack.c.l.b16 %v246
    %v1383 = vunpack.c.l.b16 %v247
    %v1384 = vunpack.c.l.b16 %v248
    %v1385 = vunpack.c.l.b16 %v249
    %v1386 = vunpack.c.l.b16 %v250
    %v1387 = vpack.c.b16 %v1372, %v1371
    %v1388 = vpack.c.b16 %v1374, %v1373
    %v1389 = vpack.c.b16 %v1376, %v1375
    %v1390 = vpack.c.b16 %v1378, %v1377
    %v1391 = vpack.c.b16 %v1380, %v1379
    %v1392 = vpack.c.b16 %v1382, %v1381
    %v1393 = vpack.c.b16 %v1384, %v1383
    %v1394 = vpack.c.b16 %v1386, %v1385
    %1403 = vmatprep.subr.bf16.mxu0 0
    %1404 = vmatpush1.bf16.xpose.msra.mxu0 %v1387
    %1405 = vmatprep.subr.bf16.mxu0 0
    %1406 = vmatpush1.bf16.xpose.msra.mxu0 %v1388
    %1407 = vmatprep.subr.bf16.mxu0 0
    %1408 = vmatpush1.bf16.xpose.msra.mxu0 %v1389
    %1409 = vmatprep.subr.bf16.mxu0 0
    %1410 = vmatpush1.bf16.xpose.msra.mxu0 %v1390
    %1411 = vmatprep.subr.bf16.mxu0 0
    %1412 = vmatpush1.bf16.xpose.msra.mxu0 %v1391
    %1413 = vmatprep.subr.bf16.mxu0 0
    %1414 = vmatpush1.bf16.xpose.msra.mxu0 %v1392
    %1415 = vmatprep.subr.bf16.mxu0 0
    %1416 = vmatpush1.bf16.xpose.msra.mxu0 %v1393
    %1417 = vmatprep.subr.bf16.mxu0 0
    %1418 = vmatpush1.bf16.xpose.msra.mxu0 %v1394
    %1419 = vmatprep.subr.bf16.mxu0 0
    %1420 = vmatpush1.bf16.xpose.msra.mxu0 0
    %1421 = vmatprep.subr.bf16.mxu0 0
    %1422 = vmatpush1.bf16.xpose.msra.mxu0 0
    %1423 = vmatprep.subr.bf16.mxu0 0
    %1424 = vmatpush1.bf16.xpose.msra.mxu0 0
    %1425 = vmatprep.subr.bf16.mxu0 0
    %1426 = vmatpush1.bf16.xpose.msra.mxu0 0
    %1427 = vmatprep.subr.bf16.mxu0 0
    %1428 = vmatpush1.bf16.xpose.msra.mxu0 0
    %1429 = vmatprep.subr.bf16.mxu0 0
    %1430 = vmatpush1.bf16.xpose.msra.mxu0 0
    %1431 = vmatprep.subr.bf16.mxu0 0
    %1432 = vmatpush1.bf16.xpose.msra.mxu0 0
    %1433 = vmatprep.subr.bf16.mxu0 0
    %1434 = vmatpush1.bf16.xpose.msra.mxu0 0
    %1435 = vmatprep.mubr.bf16.mxu0 0
    %1436 = vmatmul.mubr.bf16.gmra.mrb[0].mxu0 %v39
    %v1437 = vpop.f32.mrb[0].mxu0
    %v1438 = vadd.f32 0.0, %v1437
    %v1439 = vpop.f32.mrb[0].mxu0
    %v1440 = vpop.f32.mrb[0].mxu0
    %v1441 = vpop.f32.mrb[0].mxu0
    %1442 = vdwg.mxu0
    %v1459 = vunpack.c.l.b16 %v251
    %v1460 = vunpack.c.l.b16 %v252
    %v1461 = vunpack.c.l.b16 %v253
    %v1462 = vunpack.c.l.b16 %v254
    %v1463 = vunpack.c.l.b16 %v255
    %v1464 = vunpack.c.l.b16 %v256
    %v1465 = vunpack.c.l.b16 %v257
    %v1466 = vunpack.c.l.b16 %v258
    %v1467 = vunpack.c.l.b16 %v259
    %v1468 = vunpack.c.l.b16 %v260
    %v1469 = vunpack.c.l.b16 %v261
    %v1470 = vunpack.c.l.b16 %v262
    %v1471 = vunpack.c.l.b16 %v263
    %v1472 = vunpack.c.l.b16 %v264
    %v1473 = vunpack.c.l.b16 %v265
    %v1474 = vunpack.c.l.b16 %v266
    %v1475 = vpack.c.b16 %v1460, %v1459
    %v1476 = vpack.c.b16 %v1462, %v1461
    %v1477 = vpack.c.b16 %v1464, %v1463
    %v1478 = vpack.c.b16 %v1466, %v1465
    %v1479 = vpack.c.b16 %v1468, %v1467
    %v1480 = vpack.c.b16 %v1470, %v1469
    %v1481 = vpack.c.b16 %v1472, %v1471
    %v1482 = vpack.c.b16 %v1474, %v1473
    %1491 = vmatprep.subr.bf16.mxu0 0
    %1492 = vmatpush1.bf16.xpose.msra.mxu0 %v1475
    %1493 = vmatprep.subr.bf16.mxu0 0
    %1494 = vmatpush1.bf16.xpose.msra.mxu0 %v1476
    %1495 = vmatprep.subr.bf16.mxu0 0
    %1496 = vmatpush1.bf16.xpose.msra.mxu0 %v1477
    %1497 = vmatprep.subr.bf16.mxu0 0
    %1498 = vmatpush1.bf16.xpose.msra.mxu0 %v1478
    %1499 = vmatprep.subr.bf16.mxu0 0
    %1500 = vmatpush1.bf16.xpose.msra.mxu0 %v1479
    %1501 = vmatprep.subr.bf16.mxu0 0
    %1502 = vmatpush1.bf16.xpose.msra.mxu0 %v1480
    %1503 = vmatprep.subr.bf16.mxu0 0
    %1504 = vmatpush1.bf16.xpose.msra.mxu0 %v1481
    %1505 = vmatprep.subr.bf16.mxu0 0
    %1506 = vmatpush1.bf16.xpose.msra.mxu0 %v1482
    %1507 = vmatprep.subr.bf16.mxu0 0
    %1508 = vmatpush1.bf16.xpose.msra.mxu0 0
    %1509 = vmatprep.subr.bf16.mxu0 0
    %1510 = vmatpush1.bf16.xpose.msra.mxu0 0
    %1511 = vmatprep.subr.bf16.mxu0 0
    %1512 = vmatpush1.bf16.xpose.msra.mxu0 0
    %1513 = vmatprep.subr.bf16.mxu0 0
    %1514 = vmatpush1.bf16.xpose.msra.mxu0 0
    %1515 = vmatprep.subr.bf16.mxu0 0
    %1516 = vmatpush1.bf16.xpose.msra.mxu0 0
    %1517 = vmatprep.subr.bf16.mxu0 0
    %1518 = vmatpush1.bf16.xpose.msra.mxu0 0
    %1519 = vmatprep.subr.bf16.mxu0 0
    %1520 = vmatpush1.bf16.xpose.msra.mxu0 0
    %1521 = vmatprep.subr.bf16.mxu0 0
    %1522 = vmatpush1.bf16.xpose.msra.mxu0 0
    %1523 = vmatprep.mubr.bf16.mxu0 0
    %1524 = vmatmul.mubr.bf16.gmra.mrb[0].mxu0 %v40
    %v1525 = vpop.f32.mrb[0].mxu0
    %v1526 = vadd.f32 0.0, %v1525
    %v1527 = vpop.f32.mrb[0].mxu0
    %v1528 = vpop.f32.mrb[0].mxu0
    %v1529 = vpop.f32.mrb[0].mxu0
    %1530 = vdwg.mxu0
    %v1547 = vunpack.c.l.b16 %v267
    %v1548 = vunpack.c.l.b16 %v268
    %v1549 = vunpack.c.l.b16 %v269
    %v1550 = vunpack.c.l.b16 %v270
    %v1551 = vunpack.c.l.b16 %v271
    %v1552 = vunpack.c.l.b16 %v272
    %v1553 = vunpack.c.l.b16 %v273
    %v1554 = vunpack.c.l.b16 %v274
    %v1555 = vunpack.c.l.b16 %v275
    %v1556 = vunpack.c.l.b16 %v276
    %v1557 = vunpack.c.l.b16 %v277
    %v1558 = vunpack.c.l.b16 %v278
    %v1559 = vunpack.c.l.b16 %v279
    %v1560 = vunpack.c.l.b16 %v280
    %v1561 = vunpack.c.l.b16 %v281
    %v1562 = vunpack.c.l.b16 %v282
    %v1563 = vpack.c.b16 %v1548, %v1547
    %v1564 = vpack.c.b16 %v1550, %v1549
    %v1565 = vpack.c.b16 %v1552, %v1551
    %v1566 = vpack.c.b16 %v1554, %v1553
    %v1567 = vpack.c.b16 %v1556, %v1555
    %v1568 = vpack.c.b16 %v1558, %v1557
    %v1569 = vpack.c.b16 %v1560, %v1559
    %v1570 = vpack.c.b16 %v1562, %v1561
    %1579 = vmatprep.subr.bf16.mxu0 0
    %1580 = vmatpush1.bf16.xpose.msra.mxu0 %v1563
    %1581 = vmatprep.subr.bf16.mxu0 0
    %1582 = vmatpush1.bf16.xpose.msra.mxu0 %v1564
    %1583 = vmatprep.subr.bf16.mxu0 0
    %1584 = vmatpush1.bf16.xpose.msra.mxu0 %v1565
    %1585 = vmatprep.subr.bf16.mxu0 0
    %1586 = vmatpush1.bf16.xpose.msra.mxu0 %v1566
    %1587 = vmatprep.subr.bf16.mxu0 0
    %1588 = vmatpush1.bf16.xpose.msra.mxu0 %v1567
    %1589 = vmatprep.subr.bf16.mxu0 0
    %1590 = vmatpush1.bf16.xpose.msra.mxu0 %v1568
    %1591 = vmatprep.subr.bf16.mxu0 0
    %1592 = vmatpush1.bf16.xpose.msra.mxu0 %v1569
    %1593 = vmatprep.subr.bf16.mxu0 0
    %1594 = vmatpush1.bf16.xpose.msra.mxu0 %v1570
    %1595 = vmatprep.subr.bf16.mxu0 0
    %1596 = vmatpush1.bf16.xpose.msra.mxu0 0
    %1597 = vmatprep.subr.bf16.mxu0 0
    %1598 = vmatpush1.bf16.xpose.msra.mxu0 0
    %1599 = vmatprep.subr.bf16.mxu0 0
    %1600 = vmatpush1.bf16.xpose.msra.mxu0 0
    %1601 = vmatprep.subr.bf16.mxu0 0
    %1602 = vmatpush1.bf16.xpose.msra.mxu0 0
    %1603 = vmatprep.subr.bf16.mxu0 0
    %1604 = vmatpush1.bf16.xpose.msra.mxu0 0
    %1605 = vmatprep.subr.bf16.mxu0 0
    %1606 = vmatpush1.bf16.xpose.msra.mxu0 0
    %1607 = vmatprep.subr.bf16.mxu0 0
    %1608 = vmatpush1.bf16.xpose.msra.mxu0 0
    %1609 = vmatprep.subr.bf16.mxu0 0
    %1610 = vmatpush1.bf16.xpose.msra.mxu0 0
    %1611 = vmatprep.mubr.bf16.mxu0 0
    %1612 = vmatmul.mubr.bf16.gmra.mrb[0].mxu0 %v41
    %v1613 = vpop.f32.mrb[0].mxu0
    %v1614 = vadd.f32 0.0, %v1613
    %v1615 = vpop.f32.mrb[0].mxu0
    %v1616 = vpop.f32.mrb[0].mxu0
    %v1617 = vpop.f32.mrb[0].mxu0
    %1618 = vdwg.mxu0
    %v1635 = vunpack.c.l.b16 %v283
    %v1636 = vunpack.c.l.b16 %v284
    %v1637 = vunpack.c.l.b16 %v285
    %v1638 = vunpack.c.l.b16 %v286
    %v1639 = vunpack.c.l.b16 %v287
    %v1640 = vunpack.c.l.b16 %v288
    %v1641 = vunpack.c.l.b16 %v289
    %v1642 = vunpack.c.l.b16 %v290
    %v1643 = vunpack.c.l.b16 %v291
    %v1644 = vunpack.c.l.b16 %v292
    %v1645 = vunpack.c.l.b16 %v293
    %v1646 = vunpack.c.l.b16 %v294
    %v1647 = vunpack.c.l.b16 %v295
    %v1648 = vunpack.c.l.b16 %v296
    %v1649 = vunpack.c.l.b16 %v297
    %v1650 = vunpack.c.l.b16 %v298
    %v1651 = vpack.c.b16 %v1636, %v1635
    %v1652 = vpack.c.b16 %v1638, %v1637
    %v1653 = vpack.c.b16 %v1640, %v1639
    %v1654 = vpack.c.b16 %v1642, %v1641
    %v1655 = vpack.c.b16 %v1644, %v1643
    %v1656 = vpack.c.b16 %v1646, %v1645
    %v1657 = vpack.c.b16 %v1648, %v1647
    %v1658 = vpack.c.b16 %v1650, %v1649
    %1667 = vmatprep.subr.bf16.mxu0 0
    %1668 = vmatpush1.bf16.xpose.msra.mxu0 %v1651
    %1669 = vmatprep.subr.bf16.mxu0 0
    %1670 = vmatpush1.bf16.xpose.msra.mxu0 %v1652
    %1671 = vmatprep.subr.bf16.mxu0 0
    %1672 = vmatpush1.bf16.xpose.msra.mxu0 %v1653
    %1673 = vmatprep.subr.bf16.mxu0 0
    %1674 = vmatpush1.bf16.xpose.msra.mxu0 %v1654
    %1675 = vmatprep.subr.bf16.mxu0 0
    %1676 = vmatpush1.bf16.xpose.msra.mxu0 %v1655
    %1677 = vmatprep.subr.bf16.mxu0 0
    %1678 = vmatpush1.bf16.xpose.msra.mxu0 %v1656
    %1679 = vmatprep.subr.bf16.mxu0 0
    %1680 = vmatpush1.bf16.xpose.msra.mxu0 %v1657
    %1681 = vmatprep.subr.bf16.mxu0 0
    %1682 = vmatpush1.bf16.xpose.msra.mxu0 %v1658
    %1683 = vmatprep.subr.bf16.mxu0 0
    %1684 = vmatpush1.bf16.xpose.msra.mxu0 0
    %1685 = vmatprep.subr.bf16.mxu0 0
    %1686 = vmatpush1.bf16.xpose.msra.mxu0 0
    %1687 = vmatprep.subr.bf16.mxu0 0
    %1688 = vmatpush1.bf16.xpose.msra.mxu0 0
    %1689 = vmatprep.subr.bf16.mxu0 0
    %1690 = vmatpush1.bf16.xpose.msra.mxu0 0
    %1691 = vmatprep.subr.bf16.mxu0 0
    %1692 = vmatpush1.bf16.xpose.msra.mxu0 0
    %1693 = vmatprep.subr.bf16.mxu0 0
    %1694 = vmatpush1.bf16.xpose.msra.mxu0 0
    %1695 = vmatprep.subr.bf16.mxu0 0
    %1696 = vmatpush1.bf16.xpose.msra.mxu0 0
    %1697 = vmatprep.subr.bf16.mxu0 0
    %1698 = vmatpush1.bf16.xpose.msra.mxu0 0
    %1699 = vmatprep.mubr.bf16.mxu0 0
    %1700 = vmatmul.mubr.bf16.gmra.mrb[0].mxu0 %v42
    %v1701 = vpop.f32.mrb[0].mxu0
    %v1702 = vadd.f32 0.0, %v1701
    %v1703 = vpop.f32.mrb[0].mxu0
    %v1704 = vpop.f32.mrb[0].mxu0
    %v1705 = vpop.f32.mrb[0].mxu0
    %1706 = vdwg.mxu0
    %v1707 = vlaneseq
    %v1708 = vand.u32 %v1707, 127
    %vm1709 = vcmp.lt.s32.totalorder %v1708, 8
    %v1710 = vsel %vm1709, %v382, -1e+30
    %v1711 = vsel %vm1709, %v470, -1e+30
    %v1712 = vsel %vm1709, %v558, -1e+30
    %v1713 = vsel %vm1709, %v646, -1e+30
    %v1714 = vsel %vm1709, %v734, -1e+30
    %v1715 = vsel %vm1709, %v822, -1e+30
    %v1716 = vsel %vm1709, %v910, -1e+30
    %v1717 = vsel %vm1709, %v998, -1e+30
    %v1718 = vsel %vm1709, %v1086, -1e+30
    %v1719 = vsel %vm1709, %v1174, -1e+30
    %v1720 = vsel %vm1709, %v1262, -1e+30
    %v1721 = vsel %vm1709, %v1350, -1e+30
    %v1722 = vsel %vm1709, %v1438, -1e+30
    %v1723 = vsel %vm1709, %v1526, -1e+30
    %v1724 = vsel %vm1709, %v1614, -1e+30
    %v1725 = vsel %vm1709, %v1702, -1e+30
    %vm1726 = vcmask 1040384
    %v1727 = vsel %vm1726, %v1710, -inf
    %1728 = vmax.xlane.f32.xlu0 %v1727
    %v1729 = vpop.xlane.xlu0 %1728
    %v1730 = vsel %vm1726, %v1711, -inf
    %1731 = vmax.xlane.f32.xlu0 %v1730
    %v1732 = vpop.xlane.xlu0 %1731
    %v1733 = vsel %vm1726, %v1712, -inf
    %1734 = vmax.xlane.f32.xlu0 %v1733
    %v1735 = vpop.xlane.xlu0 %1734
    %v1736 = vsel %vm1726, %v1713, -inf
    %1737 = vmax.xlane.f32.xlu0 %v1736
    %v1738 = vpop.xlane.xlu0 %1737
    %v1739 = vsel %vm1726, %v1714, -inf
    %1740 = vmax.xlane.f32.xlu0 %v1739
    %v1741 = vpop.xlane.xlu0 %1740
    %v1742 = vsel %vm1726, %v1715, -inf
    %1743 = vmax.xlane.f32.xlu0 %v1742
    %v1744 = vpop.xlane.xlu0 %1743
    %v1745 = vsel %vm1726, %v1716, -inf
    %1746 = vmax.xlane.f32.xlu0 %v1745
    %v1747 = vpop.xlane.xlu0 %1746
    %v1748 = vsel %vm1726, %v1717, -inf
    %1749 = vmax.xlane.f32.xlu0 %v1748
    %v1750 = vpop.xlane.xlu0 %1749
    %v1751 = vsel %vm1726, %v1718, -inf
    %1752 = vmax.xlane.f32.xlu0 %v1751
    %v1753 = vpop.xlane.xlu0 %1752
    %v1754 = vsel %vm1726, %v1719, -inf
    %1755 = vmax.xlane.f32.xlu0 %v1754
    %v1756 = vpop.xlane.xlu0 %1755
    %v1757 = vsel %vm1726, %v1720, -inf
    %1758 = vmax.xlane.f32.xlu0 %v1757
    %v1759 = vpop.xlane.xlu0 %1758
    %v1760 = vsel %vm1726, %v1721, -inf
    %1761 = vmax.xlane.f32.xlu0 %v1760
    %v1762 = vpop.xlane.xlu0 %1761
    %v1763 = vsel %vm1726, %v1722, -inf
    %1764 = vmax.xlane.f32.xlu0 %v1763
    %v1765 = vpop.xlane.xlu0 %1764
    %v1766 = vsel %vm1726, %v1723, -inf
    %1767 = vmax.xlane.f32.xlu0 %v1766
    %v1768 = vpop.xlane.xlu0 %1767
    %v1769 = vsel %vm1726, %v1724, -inf
    %1770 = vmax.xlane.f32.xlu0 %v1769
    %v1771 = vpop.xlane.xlu0 %1770
    %v1772 = vsel %vm1726, %v1725, -inf
    %1773 = vmax.xlane.f32.xlu0 %v1772
    %v1774 = vpop.xlane.xlu0 %1773
    %v1775 = vsub.f32 %v1710, %v1729
    %v1776 = vsub.f32 %v1711, %v1732
    %v1777 = vsub.f32 %v1712, %v1735
    %v1778 = vsub.f32 %v1713, %v1738
    %v1779 = vsub.f32 %v1714, %v1741
    %v1780 = vsub.f32 %v1715, %v1744
    %v1781 = vsub.f32 %v1716, %v1747
    %v1782 = vsub.f32 %v1717, %v1750
    %v1783 = vsub.f32 %v1718, %v1753
    %v1784 = vsub.f32 %v1719, %v1756
    %v1785 = vsub.f32 %v1720, %v1759
    %v1786 = vsub.f32 %v1721, %v1762
    %v1787 = vsub.f32 %v1722, %v1765
    %v1788 = vsub.f32 %v1723, %v1768
    %v1789 = vsub.f32 %v1724, %v1771
    %v1790 = vsub.f32 %v1725, %v1774
    %v1791 = vmul.f32 %v1775, 1.442695
    %v1792 = vpow.pop %v1791
    %v1793 = vmul.f32 %v1776, 1.442695
    %v1794 = vpow.pop %v1793
    %v1795 = vmul.f32 %v1777, 1.442695
    %v1796 = vpow.pop %v1795
    %v1797 = vmul.f32 %v1778, 1.442695
    %v1798 = vpow.pop %v1797
    %v1799 = vmul.f32 %v1779, 1.442695
    %v1800 = vpow.pop %v1799
    %v1801 = vmul.f32 %v1780, 1.442695
    %v1802 = vpow.pop %v1801
    %v1803 = vmul.f32 %v1781, 1.442695
    %v1804 = vpow.pop %v1803
    %v1805 = vmul.f32 %v1782, 1.442695
    %v1806 = vpow.pop %v1805
    %v1807 = vmul.f32 %v1783, 1.442695
    %v1808 = vpow.pop %v1807
    %v1809 = vmul.f32 %v1784, 1.442695
    %v1810 = vpow.pop %v1809
    %v1811 = vmul.f32 %v1785, 1.442695
    %v1812 = vpow.pop %v1811
    %v1813 = vmul.f32 %v1786, 1.442695
    %v1814 = vpow.pop %v1813
    %v1815 = vmul.f32 %v1787, 1.442695
    %v1816 = vpow.pop %v1815
    %v1817 = vmul.f32 %v1788, 1.442695
    %v1818 = vpow.pop %v1817
    %v1819 = vmul.f32 %v1789, 1.442695
    %v1820 = vpow.pop %v1819
    %v1821 = vmul.f32 %v1790, 1.442695
    %v1822 = vpow.pop %v1821
    %v1823 = vsel %vm1726, %v1792, 0.0
    %1824 = vadd.xlane.f32.xlu0 %v1823
    %v1825 = vpop.xlane.xlu0 %1824
    %v1826 = vsel %vm1726, %v1794, 0.0
    %1827 = vadd.xlane.f32.xlu0 %v1826
    %v1828 = vpop.xlane.xlu0 %1827
    %v1829 = vsel %vm1726, %v1796, 0.0
    %1830 = vadd.xlane.f32.xlu0 %v1829
    %v1831 = vpop.xlane.xlu0 %1830
    %v1832 = vsel %vm1726, %v1798, 0.0
    %1833 = vadd.xlane.f32.xlu0 %v1832
    %v1834 = vpop.xlane.xlu0 %1833
    %v1835 = vsel %vm1726, %v1800, 0.0
    %1836 = vadd.xlane.f32.xlu0 %v1835
    %v1837 = vpop.xlane.xlu0 %1836
    %v1838 = vsel %vm1726, %v1802, 0.0
    %1839 = vadd.xlane.f32.xlu0 %v1838
    %v1840 = vpop.xlane.xlu0 %1839
    %v1841 = vsel %vm1726, %v1804, 0.0
    %1842 = vadd.xlane.f32.xlu0 %v1841
    %v1843 = vpop.xlane.xlu0 %1842
    %v1844 = vsel %vm1726, %v1806, 0.0
    %1845 = vadd.xlane.f32.xlu0 %v1844
    %v1846 = vpop.xlane.xlu0 %1845
    %v1847 = vsel %vm1726, %v1808, 0.0
    %1848 = vadd.xlane.f32.xlu0 %v1847
    %v1849 = vpop.xlane.xlu0 %1848
    %v1850 = vsel %vm1726, %v1810, 0.0
    %1851 = vadd.xlane.f32.xlu0 %v1850
    %v1852 = vpop.xlane.xlu0 %1851
    %v1853 = vsel %vm1726, %v1812, 0.0
    %1854 = vadd.xlane.f32.xlu0 %v1853
    %v1855 = vpop.xlane.xlu0 %1854
    %v1856 = vsel %vm1726, %v1814, 0.0
    %1857 = vadd.xlane.f32.xlu0 %v1856
    %v1858 = vpop.xlane.xlu0 %1857
    %v1859 = vsel %vm1726, %v1816, 0.0
    %1860 = vadd.xlane.f32.xlu0 %v1859
    %v1861 = vpop.xlane.xlu0 %1860
    %v1862 = vsel %vm1726, %v1818, 0.0
    %1863 = vadd.xlane.f32.xlu0 %v1862
    %v1864 = vpop.xlane.xlu0 %1863
    %v1865 = vsel %vm1726, %v1820, 0.0
    %1866 = vadd.xlane.f32.xlu0 %v1865
    %v1867 = vpop.xlane.xlu0 %1866
    %v1868 = vsel %vm1726, %v1822, 0.0
    %1869 = vadd.xlane.f32.xlu0 %v1868
    %v1870 = vpop.xlane.xlu0 %1869
    %v1871 = vrcp.pop %v1825
    %v1872 = vrcp.pop %v1828
    %v1873 = vrcp.pop %v1831
    %v1874 = vrcp.pop %v1834
    %v1875 = vrcp.pop %v1837
    %v1876 = vrcp.pop %v1840
    %v1877 = vrcp.pop %v1843
    %v1878 = vrcp.pop %v1846
    %v1879 = vrcp.pop %v1849
    %v1880 = vrcp.pop %v1852
    %v1881 = vrcp.pop %v1855
    %v1882 = vrcp.pop %v1858
    %v1883 = vrcp.pop %v1861
    %v1884 = vrcp.pop %v1864
    %v1885 = vrcp.pop %v1867
    %v1886 = vrcp.pop %v1870
    %v1887 = vmul.f32 %v1792, %v1871
    %v1888 = vmul.f32 %v1794, %v1872
    %v1889 = vmul.f32 %v1796, %v1873
    %v1890 = vmul.f32 %v1798, %v1874
    %v1891 = vmul.f32 %v1800, %v1875
    %v1892 = vmul.f32 %v1802, %v1876
    %v1893 = vmul.f32 %v1804, %v1877
    %v1894 = vmul.f32 %v1806, %v1878
    %v1895 = vmul.f32 %v1808, %v1879
    %v1896 = vmul.f32 %v1810, %v1880
    %v1897 = vmul.f32 %v1812, %v1881
    %v1898 = vmul.f32 %v1814, %v1882
    %v1899 = vmul.f32 %v1816, %v1883
    %v1900 = vmul.f32 %v1818, %v1884
    %v1901 = vmul.f32 %v1820, %v1885
    %v1902 = vmul.f32 %v1822, %v1886
    %1903 = vst [vmem:[#allocation5] sm:$0x1] %v1887
    %1904 = vst [vmem:[#allocation5 + $0x1] sm:$0x1] %v1888
    %1905 = vst [vmem:[#allocation5 + $0x2] sm:$0x1] %v1889
    %1906 = vst [vmem:[#allocation5 + $0x3] sm:$0x1] %v1890
    %1907 = vst [vmem:[#allocation5 + $0x4] sm:$0x1] %v1891
    %1908 = vst [vmem:[#allocation5 + $0x5] sm:$0x1] %v1892
    %1909 = vst [vmem:[#allocation5 + $0x6] sm:$0x1] %v1893
    %1910 = vst [vmem:[#allocation5 + $0x7] sm:$0x1] %v1894
    %1911 = vst [vmem:[#allocation5 + $0x8] sm:$0x1] %v1895
    %1912 = vst [vmem:[#allocation5 + $0x9] sm:$0x1] %v1896
    %1913 = vst [vmem:[#allocation5 + $0xa] sm:$0x1] %v1897
    %1914 = vst [vmem:[#allocation5 + $0xb] sm:$0x1] %v1898
    %1915 = vst [vmem:[#allocation5 + $0xc] sm:$0x1] %v1899
    %1916 = vst [vmem:[#allocation5 + $0xd] sm:$0x1] %v1900
    %1917 = vst [vmem:[#allocation5 + $0xe] sm:$0x1] %v1901
    %1918 = vst [vmem:[#allocation5 + $0xf] sm:$0x1] %v1902
    // Predicated region
    $region14: #{tpu_custom_call.1} parent=1 // pred_check
      _
    $region15: #{tpu_custom_call.1} parent=1 // pred_check_branch
      %1920 = sbr.rel (0) target = $region17
    $region16: #{tpu_custom_call.1} parent=1 // pred_region
      %s1922 = ssub.s32 256, 256
      %1923 = vsyncadd [#allocation4], %s1922
      %s1924 = sshll.u32 [#allocation5], 4
      %s1925 = int_to_ptr.vmem [resolvable:$true] %s1924
      %1930 = dma.vmem_to_hbm [thread:$0]  %s1925, 256, %s2, [#allocation4], 16, 16, 1
    $region17: #{tpu_custom_call.1} parent=1 // pred_fallthru
      _
    // Predicated region
    $region18: #{tpu_custom_call.1} parent=1 // pred_check
      _
    $region19: #{tpu_custom_call.1} parent=1 // pred_check_branch
      %1932 = sbr.rel (0) target = $region21
    $region20: #{tpu_custom_call.1} parent=1 // pred_region
      %1933 = dma.done [#allocation4], 256
    $region21: #{tpu_custom_call.1} parent=1 // pred_fallthru
      _
    %1934 = vsyncpa [#allocation3], 1
    %1935 = vsyncpa [#allocation4], 1

</llo_original>
